<compile_context>
chip_gen: v5e
topology: v5e:2x2
jax: 0.10.0
libtpu: 0.0.40
codegen_flags: <defaults>
</compile_context>

<pallas_src>
import functools

import jax
import jax.numpy as jnp
from jax import lax
from jax.experimental import pallas as pl
from jax.experimental.pallas import tpu as pltpu

C_PAD = 128  # lane-dense padding of the class dimension


def dsmil_b_kernel(n_ref,                                    # SMEM scalar prefetch: [1] int32 (true N)
                   feat_ref, qmax_ref,
                   wvt_ref, bv_ref, wq1t_ref, bq1_ref, wq2t_ref, bq2_ref,
                   wcp_ref, bc_ref,
                   attn_ref, bag_logits_ref, bagfeat_ref,
                   m_sc, l_sc, acc_sc,
                   *, num_classes):
    i = pl.program_id(0)
    tn = feat_ref.shape[0]

    @pl.when(i == 0)
    def _init():
        m_sc[...] = jnp.full(m_sc.shape, -jnp.inf, dtype=m_sc.dtype)
        l_sc[...] = jnp.zeros(l_sc.shape, dtype=l_sc.dtype)
        acc_sc[...] = jnp.zeros(acc_sc.shape, dtype=acc_sc.dtype)

    feats = feat_ref[...]                                    # [TN, D] bf16

    # value head: ReLU(x @ Wv^T + bv)         (Dropout == identity at eval)
    value = jnp.maximum(
        jnp.dot(feats, wvt_ref[...], preferred_element_type=jnp.float32)
        + bv_ref[...], 0.0)                                  # [TN, D] f32

    # query head: Tanh(ReLU(x @ Wq1^T + b1) @ Wq2^T + b2)
    h = jnp.maximum(
        jnp.dot(feats, wq1t_ref[...], preferred_element_type=jnp.float32)
        + bq1_ref[...], 0.0)                                 # [TN, L1] f32
    query = jnp.tanh(
        jnp.dot(h.astype(jnp.bfloat16), wq2t_ref[...],
                preferred_element_type=jnp.float32)
        + bq2_ref[...])                                      # [TN, L2] f32

    # Attention logits vs. the per-class top-1 queries, in [class, instance]
    # orientation (classes on sublanes, instances on lanes).  qmax_ref already
    # carries the 1/sqrt(L2) scale and the zero padding up to C_PAD classes.
    s = lax.dot_general(qmax_ref[...], query,
                        (((1,), (1,)), ((), ())),
                        preferred_element_type=jnp.float32)  # [C_PAD, TN]

    # Mask instance columns past the true N (wrapper zero-pads N up to a
    # multiple of TN).
    col = i * tn + lax.broadcasted_iota(jnp.int32, s.shape, 1)
    s = jnp.where(col < n_ref[0], s, -jnp.inf)

    attn_ref[...] = s                                        # raw logits

    # Online softmax over instances; accumulate bag_feature = attn^T @ value.
    m_prev = m_sc[...]                                       # [C_PAD, 1]
    m_new = jnp.maximum(m_prev, jnp.max(s, axis=1, keepdims=True))
    alpha = jnp.exp(m_prev - m_new)                          # [C_PAD, 1]
    p = jnp.exp(s - m_new)                                   # [C_PAD, TN]
    l_sc[...] = alpha * l_sc[...] + jnp.sum(p, axis=1, keepdims=True)
    acc_sc[...] = alpha * acc_sc[...] + jnp.dot(
        p.astype(jnp.bfloat16), value.astype(jnp.bfloat16),
        preferred_element_type=jnp.float32)                  # [C_PAD, D]
    m_sc[...] = m_new

    @pl.when(i == pl.num_programs(0) - 1)
    def _finalize():
        inv_l = pl.reciprocal(l_sc[...], approx=True)        # [C_PAD, 1]
        bag = acc_sc[...] * inv_l                            # [C_PAD, D]
        bagfeat_ref[...] = bag[:num_classes, :]              # [C, D]

        # Conv1d(C, C, kernel_size=D) on an unbatched [C, D] input == full
        # contraction of weight[C_out, C_in, D] with bag_feature.  The weight
        # is passed pre-permuted to [C_in, C_out, D]; this becomes C tiny MXU
        # matvecs.
        logits = bc_ref[...]                                 # [1, C]
        for ci in range(num_classes):
            logits = logits + lax.dot_general(
                bag[ci:ci + 1, :], wcp_ref[ci],              # [1,D] x [C,D] contract D
                (((1,), (1,)), ((), ())),
                preferred_element_type=jnp.float32)          # [1, C]
        bag_logits_ref[...] = logits


def dsmil_b_forward(features, instance_logits, params, *, tile_n=128):
    features = features.astype(jnp.float32)
    instance_logits = instance_logits.astype(jnp.float32)
    N, D = features.shape
    C = instance_logits.shape[1]
    L1 = params["wq1"].shape[0]
    L2 = params["wq2"].shape[0]
    assert C <= C_PAD

    # ---- hoisted O(C) work: per-class top-1 instance and its query ---------
    idx = jnp.argmax(instance_logits, axis=0)                 # idxs[0] of descending sort
    feature_max = features[idx]                               # [C, D]
    h_max = jax.nn.relu(feature_max @ params["wq1"].T + params["bq1"])
    query_max = jnp.tanh(h_max @ params["wq2"].T + params["bq2"])   # [C, L2]
    scale = 1.0 / jnp.sqrt(jnp.float32(L2))
    qmax_pad = jnp.zeros((C_PAD, L2), jnp.float32).at[:C].set(query_max * scale)

    # ---- weight prep: pre-transposed, bf16 for the big MXU operands --------
    wvt = params["wv"].T.astype(jnp.bfloat16)                 # [D, D]
    wq1t = params["wq1"].T.astype(jnp.bfloat16)               # [D, L1]
    wq2t = params["wq2"].T.astype(jnp.bfloat16)               # [L1, L2]
    bv = params["bv"][None, :].astype(jnp.float32)
    bq1 = params["bq1"][None, :].astype(jnp.float32)
    bq2 = params["bq2"][None, :].astype(jnp.float32)
    wcp = jnp.transpose(params["wc"], (1, 0, 2)).astype(jnp.float32)   # [C_in, C_out, D]
    bc = params["bc"][None, :].astype(jnp.float32)

    # ---- pad N to a tile multiple and stream tiles through the grid --------
    tn = tile_n                                               # multiple of 128 (lane-dense attn tile)
    n_pad = pl.cdiv(N, tn) * tn
    feats_bf = jnp.zeros((n_pad, D), jnp.bfloat16).at[:N].set(
        features.astype(jnp.bfloat16))
    n_scalar = jnp.array([N], jnp.int32)

    const2 = lambda i, n: (0, 0)
    grid_spec = pltpu.PrefetchScalarGridSpec(
        num_scalar_prefetch=1,
        grid=(n_pad // tn,),
        in_specs=[
            pl.BlockSpec((tn, D), lambda i, n: (i, 0)),       # features tile (bf16)
            pl.BlockSpec((C_PAD, L2), const2),                # scaled/padded query_max
            pl.BlockSpec((D, D), const2),                     # Wv^T   (bf16, resident)
            pl.BlockSpec((1, D), const2),                     # bv
            pl.BlockSpec((D, L1), const2),                    # Wq1^T  (bf16, resident)
            pl.BlockSpec((1, L1), const2),                    # bq1
            pl.BlockSpec((L1, L2), const2),                   # Wq2^T  (bf16, resident)
            pl.BlockSpec((1, L2), const2),                    # bq2
            pl.BlockSpec((C, C, D), lambda i, n: (0, 0, 0)),  # conv weight [C_in, C_out, D]
            pl.BlockSpec((1, C), const2),                     # bc
        ],
        out_specs=[
            pl.BlockSpec((C_PAD, tn), lambda i, n: (0, i)),   # raw attn logits (class-major)
            pl.BlockSpec((1, C), const2),                     # bag_logits
            pl.BlockSpec((C, D), const2),                     # bag_feature
        ],
        scratch_shapes=[
            pltpu.VMEM((C_PAD, 1), jnp.float32),              # running max
            pltpu.VMEM((C_PAD, 1), jnp.float32),              # running sum
            pltpu.VMEM((C_PAD, D), jnp.float32),              # bag_feature accumulator
        ],
    )
    out_shapes = (
        jax.ShapeDtypeStruct((C_PAD, n_pad), jnp.float32),    # attn logits (transposed)
        jax.ShapeDtypeStruct((1, C), jnp.float32),            # bag_logits
        jax.ShapeDtypeStruct((C, D), jnp.float32),            # bag_feature
    )

    attn_t, bag_logits, bag_feature = pl.pallas_call(
        functools.partial(dsmil_b_kernel, num_classes=C),
        out_shape=out_shapes,
        grid_spec=grid_spec,
        compiler_params=pltpu.CompilerParams(
            dimension_semantics=("arbitrary",),               # N is a softmax reduction axis
            vmem_limit_bytes=48 * 1024 * 1024,
        ),
    )(n_scalar, feats_bf, qmax_pad, wvt, bv, wq1t, bq1, wq2t, bq2, wcp, bc)

    # Exact softmax normalization over instances (O(N*C), done in the wrapper;
    # bag_feature was already normalized in-kernel by the online softmax).
    attn_score = jax.nn.softmax(attn_t[:C, :N].T, axis=0)     # [N, C]
    return bag_logits[0], attn_score, bag_feature


def dsmil_b_ref(features, instance_logits, p):
    """Pure-JAX f32 reference matching the PyTorch forward (eval mode)."""
    value = jax.nn.relu(features @ p["wv"].T + p["bv"])

    def qnet(x):
        h = jax.nn.relu(x @ p["wq1"].T + p["bq1"])
        return jnp.tanh(h @ p["wq2"].T + p["bq2"])

    query = qnet(features)
    idx = jnp.argmax(instance_logits, axis=0)                 # idxs[0] of descending sort
    feature_max = features[idx]
    query_max = qnet(feature_max)
    L2 = p["wq2"].shape[0]
    attn = (query @ query_max.T) / jnp.sqrt(jnp.float32(L2))
    attn_score = jax.nn.softmax(attn, axis=0)
    bag_feature = attn_score.T @ value
    bag_logits = jnp.einsum("oid,id->o", p["wc"], bag_feature) + p["bc"]
    return bag_logits, attn_score, bag_feature


def init_params(key, num_classes, size):
    D, L1, L2 = size
    ks = jax.random.split(key, 8)

    def lin(kw, kb, fan_out, fan_in):
        bound = 1.0 / jnp.sqrt(jnp.float32(fan_in))
        w = jax.random.uniform(kw, (fan_out, fan_in), jnp.float32, -bound, bound)
        b = jax.random.uniform(kb, (fan_out,), jnp.float32, -bound, bound)
        return w, b

    wq1, bq1 = lin(ks[0], ks[1], L1, D)
    wq2, bq2 = lin(ks[2], ks[3], L2, L1)
    wv, bv = lin(ks[4], ks[5], D, D)
    # Conv1d(C, C, kernel_size=D): fan_in = C * D
    bound = 1.0 / jnp.sqrt(jnp.float32(num_classes * D))
    wc = jax.random.uniform(ks[6], (num_classes, num_classes, D),
                            jnp.float32, -bound, bound)
    bc = jax.random.uniform(ks[7], (num_classes,), jnp.float32, -bound, bound)
    return dict(wq1=wq1, bq1=bq1, wq2=wq2, bq2=bq2, wv=wv, bv=bv, wc=wc, bc=bc)


if __name__ == "__main__":
    # Small shapes consistent with the module (real model: D=768, L1=L2=128,
    # N = thousands of WSI patches).  N=300 is deliberately NOT a multiple of
    # the tile so the padding/masking path is exercised (grid of 3 tiles).
    N, D, L1, L2, C = 300, 128, 64, 64, 4

    key = jax.random.PRNGKey(0)
    k_feat, k_logit, k_param = jax.random.split(key, 3)
    features = jax.random.normal(k_feat, (N, D), jnp.float32)
    instance_logits = jax.random.normal(k_logit, (N, C), jnp.float32)
    params = init_params(k_param, C, [D, L1, L2])

    fwd = jax.jit(functools.partial(dsmil_b_forward, tile_n=128))
    bag_logits, attn_score, bag_feature = jax.block_until_ready(
        fwd(features, instance_logits, params))

    # Correctness check against the pure-JAX f32 reference.  The kernel runs
    # the big matmuls in bf16 (f32 accumulation), so tolerances are relaxed.
    ref_logits, ref_attn, ref_bagfeat = dsmil_b_ref(features, instance_logits, params)
    assert bag_logits.shape == (C,)
    assert attn_score.shape == (N, C)
    assert bag_feature.shape == (C, D)
    assert jnp.allclose(bag_logits, ref_logits, atol=2e-2, rtol=2e-2)
    assert jnp.allclose(attn_score, ref_attn, atol=2e-2, rtol=2e-2)
    assert jnp.allclose(bag_feature, ref_bagfeat, atol=2e-2, rtol=2e-2)

    print("KERNEL_OK")
</pallas_src>

<mosaic_0001>
module attributes {stable_mosaic.version = 11 : i64} {
  func.func @dsmil_b_kernel(%arg0: i32, %arg1: memref<1xi32, #tpu.memory_space<smem>>, %arg2: memref<128x128xbf16, #tpu.memory_space<vmem>>, %arg3: memref<128x64xf32, #tpu.memory_space<vmem>>, %arg4: memref<128x128xbf16, #tpu.memory_space<vmem>>, %arg5: memref<1x128xf32, #tpu.memory_space<vmem>>, %arg6: memref<128x64xbf16, #tpu.memory_space<vmem>>, %arg7: memref<1x64xf32, #tpu.memory_space<vmem>>, %arg8: memref<64x64xbf16, #tpu.memory_space<vmem>>, %arg9: memref<1x64xf32, #tpu.memory_space<vmem>>, %arg10: memref<4x4x128xf32, #tpu.memory_space<vmem>>, %arg11: memref<1x4xf32, #tpu.memory_space<vmem>>, %arg12: memref<128x128xf32, #tpu.memory_space<vmem>>, %arg13: memref<1x4xf32, #tpu.memory_space<vmem>>, %arg14: memref<4x128xf32, #tpu.memory_space<vmem>>, %arg15: memref<128x1xf32, #tpu.memory_space<vmem>>, %arg16: memref<128x1xf32, #tpu.memory_space<vmem>>, %arg17: memref<128x128xf32, #tpu.memory_space<vmem>>) attributes {dimension_semantics = [#tpu.dimension_semantics<arbitrary>], iteration_bounds = array<i64: 3>, scalar_prefetch = 1 : i64, scratch_operands = 3 : i64, tpu.core_type = #tpu.core_type<tc>, window_params = [{transform_indices = @transform_0, window_bounds = array<i64: 128, 128>}, {pipeline_mode = #tpu.pipeline_mode<synchronous>, transform_indices = @transform_1, window_bounds = array<i64: 128, 64>}, {pipeline_mode = #tpu.pipeline_mode<synchronous>, transform_indices = @transform_2, window_bounds = array<i64: 128, 128>}, {pipeline_mode = #tpu.pipeline_mode<synchronous>, transform_indices = @transform_3, window_bounds = array<i64: 1, 128>}, {pipeline_mode = #tpu.pipeline_mode<synchronous>, transform_indices = @transform_4, window_bounds = array<i64: 128, 64>}, {pipeline_mode = #tpu.pipeline_mode<synchronous>, transform_indices = @transform_5, window_bounds = array<i64: 1, 64>}, {pipeline_mode = #tpu.pipeline_mode<synchronous>, transform_indices = @transform_6, window_bounds = array<i64: 64, 64>}, {pipeline_mode = #tpu.pipeline_mode<synchronous>, transform_indices = @transform_7, window_bounds = array<i64: 1, 64>}, {pipeline_mode = #tpu.pipeline_mode<synchronous>, transform_indices = @transform_8, window_bounds = array<i64: 4, 4, 128>}, {pipeline_mode = #tpu.pipeline_mode<synchronous>, transform_indices = @transform_9, window_bounds = array<i64: 1, 4>}, {transform_indices = @transform_10, window_bounds = array<i64: 128, 128>}, {pipeline_mode = #tpu.pipeline_mode<synchronous>, transform_indices = @transform_11, window_bounds = array<i64: 1, 4>}, {pipeline_mode = #tpu.pipeline_mode<synchronous>, transform_indices = @transform_12, window_bounds = array<i64: 4, 128>}]} {
    %c0_i32 = arith.constant 0 : i32
    %0 = arith.cmpi eq, %arg0, %c0_i32 : i32
    %1 = arith.extui %0 : i1 to i32
    %c0_i32_0 = arith.constant 0 : i32
    %2 = arith.cmpi ne, %1, %c0_i32_0 : i32
    scf.if %2 {
      %cst_41 = arith.constant 0xFF800000 : f32
      %64 = vector.broadcast %cst_41 : f32 to vector<128x1xf32>
      %c0_42 = arith.constant 0 : index
      %c0_43 = arith.constant 0 : index
      %65 = vector.load %arg15[%c0_42, %c0_43] : memref<128x1xf32, #tpu.memory_space<vmem>>, vector<128x1xf32>
      tpu.vector_store %arg15[%c0_42, %c0_43], %64 {strides = array<i32>} : memref<128x1xf32, #tpu.memory_space<vmem>>, vector<128x1xf32>,
      %cst_44 = arith.constant 0.000000e+00 : f32
      %66 = vector.broadcast %cst_44 : f32 to vector<128x1xf32>
      %c0_45 = arith.constant 0 : index
      %c0_46 = arith.constant 0 : index
      %67 = vector.load %arg16[%c0_45, %c0_46] : memref<128x1xf32, #tpu.memory_space<vmem>>, vector<128x1xf32>
      tpu.vector_store %arg16[%c0_45, %c0_46], %66 {strides = array<i32>} : memref<128x1xf32, #tpu.memory_space<vmem>>, vector<128x1xf32>,
      %cst_47 = arith.constant 0.000000e+00 : f32
      %68 = vector.broadcast %cst_47 : f32 to vector<128x128xf32>
      %c0_48 = arith.constant 0 : index
      %c0_49 = arith.constant 0 : index
      %69 = vector.load %arg17[%c0_48, %c0_49] : memref<128x128xf32, #tpu.memory_space<vmem>>, vector<128x128xf32>
      tpu.vector_store %arg17[%c0_48, %c0_49], %68 {strides = array<i32>} : memref<128x128xf32, #tpu.memory_space<vmem>>, vector<128x128xf32>,
    } else {
    }
    %c0 = arith.constant 0 : index
    %c0_1 = arith.constant 0 : index
    %3 = vector.load %arg2[%c0, %c0_1] : memref<128x128xbf16, #tpu.memory_space<vmem>>, vector<128x128xbf16>
    %c0_2 = arith.constant 0 : index
    %c0_3 = arith.constant 0 : index
    %4 = vector.load %arg4[%c0_2, %c0_3] : memref<128x128xbf16, #tpu.memory_space<vmem>>, vector<128x128xbf16>
    %cst = arith.constant dense<0.000000e+00> : vector<128x128xf32>
    %5 = tpu.matmul %3, %4, %cst {dimension_numbers = #tpu.dot_dimension_numbers<[1], [0], [0], [1], [0, 0, 1, 1], [], []>} : vector<128x128xbf16>, vector<128x128xbf16>, vector<128x128xf32> -> vector<128x128xf32>
    %c0_4 = arith.constant 0 : index
    %c0_5 = arith.constant 0 : index
    %6 = vector.load %arg5[%c0_4, %c0_5] : memref<1x128xf32, #tpu.memory_space<vmem>>, vector<1x128xf32>
    %7 = vector.broadcast %6 : vector<1x128xf32> to vector<128x128xf32>
    %8 = arith.addf %5, %7 : vector<128x128xf32>
    %cst_6 = arith.constant 0.000000e+00 : f32
    %9 = vector.broadcast %cst_6 : f32 to vector<128x128xf32>
    %10 = arith.maximumf %8, %9 : vector<128x128xf32>
    %c0_7 = arith.constant 0 : index
    %c0_8 = arith.constant 0 : index
    %11 = vector.load %arg6[%c0_7, %c0_8] : memref<128x64xbf16, #tpu.memory_space<vmem>>, vector<128x64xbf16>
    %cst_9 = arith.constant dense<0.000000e+00> : vector<128x64xf32>
    %12 = tpu.matmul %3, %11, %cst_9 {dimension_numbers = #tpu.dot_dimension_numbers<[1], [0], [0], [1], [0, 0, 1, 1], [], []>} : vector<128x128xbf16>, vector<128x64xbf16>, vector<128x64xf32> -> vector<128x64xf32>
    %c0_10 = arith.constant 0 : index
    %c0_11 = arith.constant 0 : index
    %13 = vector.load %arg7[%c0_10, %c0_11] : memref<1x64xf32, #tpu.memory_space<vmem>>, vector<1x64xf32>
    %14 = vector.broadcast %13 : vector<1x64xf32> to vector<128x64xf32>
    %15 = arith.addf %12, %14 : vector<128x64xf32>
    %cst_12 = arith.constant 0.000000e+00 : f32
    %16 = vector.broadcast %cst_12 : f32 to vector<128x64xf32>
    %17 = arith.maximumf %15, %16 : vector<128x64xf32>
    %18 = arith.truncf %17 : vector<128x64xf32> to vector<128x64xbf16>
    %c0_13 = arith.constant 0 : index
    %c0_14 = arith.constant 0 : index
    %19 = vector.load %arg8[%c0_13, %c0_14] : memref<64x64xbf16, #tpu.memory_space<vmem>>, vector<64x64xbf16>
    %cst_15 = arith.constant dense<0.000000e+00> : vector<128x64xf32>
    %20 = tpu.matmul %18, %19, %cst_15 {dimension_numbers = #tpu.dot_dimension_numbers<[1], [0], [0], [1], [0, 0, 1, 1], [], []>} : vector<128x64xbf16>, vector<64x64xbf16>, vector<128x64xf32> -> vector<128x64xf32>
    %c0_16 = arith.constant 0 : index
    %c0_17 = arith.constant 0 : index
    %21 = vector.load %arg9[%c0_16, %c0_17] : memref<1x64xf32, #tpu.memory_space<vmem>>, vector<1x64xf32>
    %22 = vector.broadcast %21 : vector<1x64xf32> to vector<128x64xf32>
    %23 = arith.addf %20, %22 : vector<128x64xf32>
    %24 = math.tanh %23 : vector<128x64xf32>
    %c0_18 = arith.constant 0 : index
    %c0_19 = arith.constant 0 : index
    %25 = vector.load %arg3[%c0_18, %c0_19] : memref<128x64xf32, #tpu.memory_space<vmem>>, vector<128x64xf32>
    %cst_20 = arith.constant dense<0.000000e+00> : vector<128x128xf32>
    %26 = tpu.matmul %25, %24, %cst_20 {dimension_numbers = #tpu.dot_dimension_numbers<[1], [1], [0], [0], [0, 0, 1, 0], [], []>} : vector<128x64xf32>, vector<128x64xf32>, vector<128x128xf32> -> vector<128x128xf32>
    %c128_i32 = arith.constant 128 : i32
    %27 = arith.muli %arg0, %c128_i32 : i32
    %28 = tpu.iota {dimensions = array<i32: 1>} : vector<128x128xi32>
    %29 = vector.broadcast %27 : i32 to vector<128x128xi32>
    %30 = arith.addi %29, %28 : vector<128x128xi32>
    %c0_21 = arith.constant 0 : index
    %31 = memref.load %arg1[%c0_21] : memref<1xi32, #tpu.memory_space<smem>>
    %32 = vector.broadcast %31 : i32 to vector<128x128xi32>
    %33 = arith.cmpi slt, %30, %32 : vector<128x128xi32>
    %cst_22 = arith.constant 0xFF800000 : f32
    %34 = vector.broadcast %cst_22 : f32 to vector<128x128xf32>
    %35 = arith.select %33, %26, %34 : vector<128x128xi1>, vector<128x128xf32>
    %c0_23 = arith.constant 0 : index
    %c0_24 = arith.constant 0 : index
    %36 = vector.load %arg12[%c0_23, %c0_24] : memref<128x128xf32, #tpu.memory_space<vmem>>, vector<128x128xf32>
    tpu.vector_store %arg12[%c0_23, %c0_24], %35 {strides = array<i32>} : memref<128x128xf32, #tpu.memory_space<vmem>>, vector<128x128xf32>,
    %c0_25 = arith.constant 0 : index
    %c0_26 = arith.constant 0 : index
    %37 = vector.load %arg15[%c0_25, %c0_26] : memref<128x1xf32, #tpu.memory_space<vmem>>, vector<128x1xf32>
    %cst_27 = arith.constant dense<0xFF800000> : vector<128xf32>
    %38 = vector.multi_reduction <maximumf>, %35, %cst_27 [1] : vector<128x128xf32> to vector<128xf32>
    %39 = vector.shape_cast %38 : vector<128xf32> to vector<128x1xf32>
    %40 = arith.maximumf %37, %39 : vector<128x1xf32>
    %41 = arith.subf %37, %40 : vector<128x1xf32>
    %42 = math.exp %41 : vector<128x1xf32>
    %43 = vector.broadcast %40 : vector<128x1xf32> to vector<128x128xf32>
    %44 = arith.subf %35, %43 : vector<128x128xf32>
    %45 = math.exp %44 : vector<128x128xf32>
    %c0_28 = arith.constant 0 : index
    %c0_29 = arith.constant 0 : index
    %46 = vector.load %arg16[%c0_28, %c0_29] : memref<128x1xf32, #tpu.memory_space<vmem>>, vector<128x1xf32>
    %47 = arith.mulf %42, %46 : vector<128x1xf32>
    %cst_30 = arith.constant dense<0.000000e+00> : vector<128xf32>
    %48 = vector.multi_reduction <add>, %45, %cst_30 [1] : vector<128x128xf32> to vector<128xf32>
    %49 = vector.shape_cast %48 : vector<128xf32> to vector<128x1xf32>
    %50 = arith.addf %47, %49 : vector<128x1xf32>
    %c0_31 = arith.constant 0 : index
    %c0_32 = arith.constant 0 : index
    %51 = vector.load %arg16[%c0_31, %c0_32] : memref<128x1xf32, #tpu.memory_space<vmem>>, vector<128x1xf32>
    tpu.vector_store %arg16[%c0_31, %c0_32], %50 {strides = array<i32>} : memref<128x1xf32, #tpu.memory_space<vmem>>, vector<128x1xf32>,
    %c0_33 = arith.constant 0 : index
    %c0_34 = arith.constant 0 : index
    %52 = vector.load %arg17[%c0_33, %c0_34] : memref<128x128xf32, #tpu.memory_space<vmem>>, vector<128x128xf32>
    %53 = vector.broadcast %42 : vector<128x1xf32> to vector<128x128xf32>
    %54 = arith.mulf %53, %52 : vector<128x128xf32>
    %55 = arith.truncf %45 : vector<128x128xf32> to vector<128x128xbf16>
    %56 = arith.truncf %10 : vector<128x128xf32> to vector<128x128xbf16>
    %cst_35 = arith.constant dense<0.000000e+00> : vector<128x128xf32>
    %57 = tpu.matmul %55, %56, %cst_35 {dimension_numbers = #tpu.dot_dimension_numbers<[1], [0], [0], [1], [0, 0, 1, 1], [], []>} : vector<128x128xbf16>, vector<128x128xbf16>, vector<128x128xf32> -> vector<128x128xf32>
    %58 = arith.addf %54, %57 : vector<128x128xf32>
    %c0_36 = arith.constant 0 : index
    %c0_37 = arith.constant 0 : index
    %59 = vector.load %arg17[%c0_36, %c0_37] : memref<128x128xf32, #tpu.memory_space<vmem>>, vector<128x128xf32>
    tpu.vector_store %arg17[%c0_36, %c0_37], %58 {strides = array<i32>} : memref<128x128xf32, #tpu.memory_space<vmem>>, vector<128x128xf32>,
    %c0_38 = arith.constant 0 : index
    %c0_39 = arith.constant 0 : index
    %60 = vector.load %arg15[%c0_38, %c0_39] : memref<128x1xf32, #tpu.memory_space<vmem>>, vector<128x1xf32>
    tpu.vector_store %arg15[%c0_38, %c0_39], %40 {strides = array<i32>} : memref<128x1xf32, #tpu.memory_space<vmem>>, vector<128x1xf32>,
    %c2_i32 = arith.constant 2 : i32
    %61 = arith.cmpi eq, %arg0, %c2_i32 : i32
    %62 = arith.extui %61 : i1 to i32
    %c0_i32_40 = arith.constant 0 : i32
    %63 = arith.cmpi ne, %62, %c0_i32_40 : i32
    scf.if %63 {
      %c0_41 = arith.constant 0 : index
      %c0_42 = arith.constant 0 : index
      %64 = vector.load %arg16[%c0_41, %c0_42] : memref<128x1xf32, #tpu.memory_space<vmem>>, vector<128x1xf32>
      %65 = tpu.reciprocal %64 {approx = true} : vector<128x1xf32> -> vector<128x1xf32>
      %c0_43 = arith.constant 0 : index
      %c0_44 = arith.constant 0 : index
      %66 = vector.load %arg17[%c0_43, %c0_44] : memref<128x128xf32, #tpu.memory_space<vmem>>, vector<128x128xf32>
      %67 = vector.broadcast %65 : vector<128x1xf32> to vector<128x128xf32>
      %68 = arith.mulf %66, %67 : vector<128x128xf32>
      %69 = vector.extract_strided_slice %68 {offsets = [0, 0], sizes = [4, 128], strides = [1, 1]} : vector<128x128xf32> to vector<4x128xf32>
      %c0_45 = arith.constant 0 : index
      %c0_46 = arith.constant 0 : index
      %70 = vector.load %arg14[%c0_45, %c0_46] : memref<4x128xf32, #tpu.memory_space<vmem>>, vector<4x128xf32>
      tpu.vector_store %arg14[%c0_45, %c0_46], %69 {strides = array<i32>} : memref<4x128xf32, #tpu.memory_space<vmem>>, vector<4x128xf32>,
      %c0_47 = arith.constant 0 : index
      %c0_48 = arith.constant 0 : index
      %71 = vector.load %arg11[%c0_47, %c0_48] : memref<1x4xf32, #tpu.memory_space<vmem>>, vector<1x4xf32>
      %72 = vector.extract_strided_slice %68 {offsets = [0, 0], sizes = [1, 128], strides = [1, 1]} : vector<128x128xf32> to vector<1x128xf32>
      %c0_49 = arith.constant 0 : index
      %c0_50 = arith.constant 0 : index
      %c0_51 = arith.constant 0 : index
      %73 = vector.load %arg10[%c0_49, %c0_50, %c0_51] : memref<4x4x128xf32, #tpu.memory_space<vmem>>, vector<1x4x128xf32>
      %74 = vector.shape_cast %73 : vector<1x4x128xf32> to vector<4x128xf32>
      %cst_52 = arith.constant dense<0.000000e+00> : vector<1x4xf32>
      %75 = tpu.matmul %72, %74, %cst_52 {dimension_numbers = #tpu.dot_dimension_numbers<[1], [1], [0], [0], [0, 0, 1, 0], [], []>} : vector<1x128xf32>, vector<4x128xf32>, vector<1x4xf32> -> vector<1x4xf32>
      %76 = arith.addf %71, %75 : vector<1x4xf32>
      %77 = vector.extract_strided_slice %68 {offsets = [1, 0], sizes = [1, 128], strides = [1, 1]} : vector<128x128xf32> to vector<1x128xf32>
      %c1 = arith.constant 1 : index
      %c0_53 = arith.constant 0 : index
      %c0_54 = arith.constant 0 : index
      %78 = vector.load %arg10[%c1, %c0_53, %c0_54] : memref<4x4x128xf32, #tpu.memory_space<vmem>>, vector<1x4x128xf32>
      %79 = vector.shape_cast %78 : vector<1x4x128xf32> to vector<4x128xf32>
      %cst_55 = arith.constant dense<0.000000e+00> : vector<1x4xf32>
      %80 = tpu.matmul %77, %79, %cst_55 {dimension_numbers = #tpu.dot_dimension_numbers<[1], [1], [0], [0], [0, 0, 1, 0], [], []>} : vector<1x128xf32>, vector<4x128xf32>, vector<1x4xf32> -> vector<1x4xf32>
      %81 = arith.addf %76, %80 : vector<1x4xf32>
      %82 = vector.extract_strided_slice %68 {offsets = [2, 0], sizes = [1, 128], strides = [1, 1]} : vector<128x128xf32> to vector<1x128xf32>
      %c2 = arith.constant 2 : index
      %c0_56 = arith.constant 0 : index
      %c0_57 = arith.constant 0 : index
      %83 = vector.load %arg10[%c2, %c0_56, %c0_57] : memref<4x4x128xf32, #tpu.memory_space<vmem>>, vector<1x4x128xf32>
      %84 = vector.shape_cast %83 : vector<1x4x128xf32> to vector<4x128xf32>
      %cst_58 = arith.constant dense<0.000000e+00> : vector<1x4xf32>
      %85 = tpu.matmul %82, %84, %cst_58 {dimension_numbers = #tpu.dot_dimension_numbers<[1], [1], [0], [0], [0, 0, 1, 0], [], []>} : vector<1x128xf32>, vector<4x128xf32>, vector<1x4xf32> -> vector<1x4xf32>
      %86 = arith.addf %81, %85 : vector<1x4xf32>
      %87 = vector.extract_strided_slice %68 {offsets = [3, 0], sizes = [1, 128], strides = [1, 1]} : vector<128x128xf32> to vector<1x128xf32>
      %c3 = arith.constant 3 : index
      %c0_59 = arith.constant 0 : index
      %c0_60 = arith.constant 0 : index
      %88 = vector.load %arg10[%c3, %c0_59, %c0_60] : memref<4x4x128xf32, #tpu.memory_space<vmem>>, vector<1x4x128xf32>
      %89 = vector.shape_cast %88 : vector<1x4x128xf32> to vector<4x128xf32>
      %cst_61 = arith.constant dense<0.000000e+00> : vector<1x4xf32>
      %90 = tpu.matmul %87, %89, %cst_61 {dimension_numbers = #tpu.dot_dimension_numbers<[1], [1], [0], [0], [0, 0, 1, 0], [], []>} : vector<1x128xf32>, vector<4x128xf32>, vector<1x4xf32> -> vector<1x4xf32>
      %91 = arith.addf %86, %90 : vector<1x4xf32>
      %c0_62 = arith.constant 0 : index
      %c0_63 = arith.constant 0 : index
      %92 = vector.load %arg13[%c0_62, %c0_63] : memref<1x4xf32, #tpu.memory_space<vmem>>, vector<1x4xf32>
      tpu.vector_store %arg13[%c0_62, %c0_63], %91 {strides = array<i32>} : memref<1x4xf32, #tpu.memory_space<vmem>>, vector<1x4xf32>,
    } else {
    }
    return
  }
  func.func @transform_0(%arg0: i32, %arg1: memref<1xi32, #tpu.memory_space<smem>>) -> (i32, i32) {
    %c0_i32 = arith.constant 0 : i32
    %c0_i32_0 = arith.constant 0 : i32
    return %arg0, %c0_i32 : i32, i32
  }
  func.func @transform_1(%arg0: i32, %arg1: memref<1xi32, #tpu.memory_space<smem>>) -> (i32, i32) {
    %c0_i32 = arith.constant 0 : i32
    %c0_i32_0 = arith.constant 0 : i32
    %c0_i32_1 = arith.constant 0 : i32
    return %c0_i32, %c0_i32_0 : i32, i32
  }
  func.func @transform_2(%arg0: i32, %arg1: memref<1xi32, #tpu.memory_space<smem>>) -> (i32, i32) {
    %c0_i32 = arith.constant 0 : i32
    %c0_i32_0 = arith.constant 0 : i32
    %c0_i32_1 = arith.constant 0 : i32
    return %c0_i32, %c0_i32_0 : i32, i32
  }
  func.func @transform_3(%arg0: i32, %arg1: memref<1xi32, #tpu.memory_space<smem>>) -> (i32, i32) {
    %c0_i32 = arith.constant 0 : i32
    %c0_i32_0 = arith.constant 0 : i32
    %c0_i32_1 = arith.constant 0 : i32
    return %c0_i32, %c0_i32_0 : i32, i32
  }
  func.func @transform_4(%arg0: i32, %arg1: memref<1xi32, #tpu.memory_space<smem>>) -> (i32, i32) {
    %c0_i32 = arith.constant 0 : i32
    %c0_i32_0 = arith.constant 0 : i32
    %c0_i32_1 = arith.constant 0 : i32
    return %c0_i32, %c0_i32_0 : i32, i32
  }
  func.func @transform_5(%arg0: i32, %arg1: memref<1xi32, #tpu.memory_space<smem>>) -> (i32, i32) {
    %c0_i32 = arith.constant 0 : i32
    %c0_i32_0 = arith.constant 0 : i32
    %c0_i32_1 = arith.constant 0 : i32
    return %c0_i32, %c0_i32_0 : i32, i32
  }
  func.func @transform_6(%arg0: i32, %arg1: memref<1xi32, #tpu.memory_space<smem>>) -> (i32, i32) {
    %c0_i32 = arith.constant 0 : i32
    %c0_i32_0 = arith.constant 0 : i32
    %c0_i32_1 = arith.constant 0 : i32
    return %c0_i32, %c0_i32_0 : i32, i32
  }
  func.func @transform_7(%arg0: i32, %arg1: memref<1xi32, #tpu.memory_space<smem>>) -> (i32, i32) {
    %c0_i32 = arith.constant 0 : i32
    %c0_i32_0 = arith.constant 0 : i32
    %c0_i32_1 = arith.constant 0 : i32
    return %c0_i32, %c0_i32_0 : i32, i32
  }
  func.func @transform_8(%arg0: i32, %arg1: memref<1xi32, #tpu.memory_space<smem>>) -> (i32, i32, i32) {
    %c0_i32 = arith.constant 0 : i32
    %c0_i32_0 = arith.constant 0 : i32
    %c0_i32_1 = arith.constant 0 : i32
    %c0_i32_2 = arith.constant 0 : i32
    return %c0_i32, %c0_i32_0, %c0_i32_1 : i32, i32, i32
  }
  func.func @transform_9(%arg0: i32, %arg1: memref<1xi32, #tpu.memory_space<smem>>) -> (i32, i32) {
    %c0_i32 = arith.constant 0 : i32
    %c0_i32_0 = arith.constant 0 : i32
    %c0_i32_1 = arith.constant 0 : i32
    return %c0_i32, %c0_i32_0 : i32, i32
  }
  func.func @transform_10(%arg0: i32, %arg1: memref<1xi32, #tpu.memory_space<smem>>) -> (i32, i32) {
    %c0_i32 = arith.constant 0 : i32
    %c0_i32_0 = arith.constant 0 : i32
    return %c0_i32, %arg0 : i32, i32
  }
  func.func @transform_11(%arg0: i32, %arg1: memref<1xi32, #tpu.memory_space<smem>>) -> (i32, i32) {
    %c0_i32 = arith.constant 0 : i32
    %c0_i32_0 = arith.constant 0 : i32
    %c0_i32_1 = arith.constant 0 : i32
    return %c0_i32, %c0_i32_0 : i32, i32
  }
  func.func @transform_12(%arg0: i32, %arg1: memref<1xi32, #tpu.memory_space<smem>>) -> (i32, i32) {
    %c0_i32 = arith.constant 0 : i32
    %c0_i32_0 = arith.constant 0 : i32
    %c0_i32_1 = arith.constant 0 : i32
    return %c0_i32, %c0_i32_0 : i32, i32
  }
}

</mosaic_0001>

<llo_original>
// kernel: dsmil_b_forward.1
$region0: #{dsmil_b_forward.1}
  #allocation0 [shape = 'u32[]', space=smem, size = 0x4, offset = 0x4, fixed_abs, tag = 'smem constant byte address 0x4 - core index']
  #allocation1 [shape = 'u32[72,128]{1,0:T(1,128)}', space=vmem, size = 0x9000, scoped, tag = 'internal scratch']
  #allocation2 [shape = 'f32[128,1]{1,0:T(8,128)}', space=vmem, size = 0x10000, scoped, tag = 'scratch operand']
  #allocation3 [shape = 'f32[128,1]{1,0:T(8,128)}', space=vmem, size = 0x10000, scoped, tag = 'scratch operand']
  #allocation4 [shape = 'f32[128,128]{1,0:T(8,128)}', space=vmem, size = 0x10000, scoped, tag = 'scratch operand']
  #allocation5 [shape = 's32[1]{0}', space=sflag, size = 0x4, scoped, tag = 'scoped memory for dsmil_b_forward.1']
  #allocation6 [shape = 's32[1]{0:T(128)S(6)}', space=smem, size = 0x200, scoped, tag = 'prefetched SMEM operand 0']
  %s0 = inlined_call_operand.<no memory space> [shape: s32[1], index: 0, kind: input, shape index: {}]
  %s1 = inlined_call_operand.vmem [shape: bf16[384,128], index: 1, kind: input, shape index: {}]
  %s2 = inlined_call_operand.vmem [shape: f32[128,64], index: 2, kind: input, shape index: {}]
  %s3 = inlined_call_operand.vmem [shape: bf16[128,128], index: 3, kind: input, shape index: {}]
  %s4 = inlined_call_operand.vmem [shape: f32[1,128], index: 4, kind: input, shape index: {}]
  %s5 = inlined_call_operand.vmem [shape: bf16[128,64], index: 5, kind: input, shape index: {}]
  %s6 = inlined_call_operand.vmem [shape: f32[1,64], index: 6, kind: input, shape index: {}]
  %s7 = inlined_call_operand.vmem [shape: bf16[64,64], index: 7, kind: input, shape index: {}]
  %s8 = inlined_call_operand.vmem [shape: f32[1,64], index: 8, kind: input, shape index: {}]
  %s9 = inlined_call_operand.vmem [shape: f32[4,4,128], index: 9, kind: input, shape index: {}]
  %s10 = inlined_call_operand.vmem [shape: f32[1,4], index: 10, kind: input, shape index: {}]
  %s11 = inlined_call_operand.vmem [shape: f32[128,384], index: 11, kind: output, shape index: {0}]
  %s12 = inlined_call_operand.hbm [shape: f32[1,4], index: 12, kind: output, shape index: {1}]
  %s13 = inlined_call_operand.hbm [shape: f32[4,128], index: 13, kind: output, shape index: {2}]
  %14 = xla_tuple %s11, %s12, %s13
  %s15 = sld [smem:[#allocation0]]
  $region131: #{dsmil_b_forward.1} parent=0
    _
  %s17 = ssub.s32 1, %s15
  %s18 = scalar_select 0, %s17, %s15
  %19 = sst [smem:[#allocation6]] %s0
  $region1: #{dsmil_b_forward.1} parent=0
    #allocation7 [shape = 'u8[131072]{0}', space=vmem, size = 0x20000, scoped, tag = 'output window, operand 0']
    #allocation8 [shape = 'u8[512]{0}', space=vmem, size = 0x400, scoped, tag = 'output window, operand 1, single buffered']
    #allocation9 [shape = 's32[2]{0}', space=sflag, size = 0x8, scoped, tag = 'scoped memory for dsmil_b_forward.1']
    #allocation10 [shape = 'u8[2048]{0}', space=vmem, size = 0x800, scoped, tag = 'output window, operand 2, single buffered']
    #allocation11 [shape = 's32[1]{0}', space=sflag, size = 0x4, scoped, tag = 'scoped memory for dsmil_b_forward.1']
    %20 = vsyncpa [#allocation9], 0
    %21 = vsyncpa [#allocation11], 0
    loop: start=0, step=1, limit=5
    $region2: #{dsmil_b_forward.1} parent=1 // loop_pre_header
      _
    $region3: #{dsmil_b_forward.1} parent=1 // loop_header
      %s23 = sphi 0, %s27
      %p24 = scmp.ge.s32.totalorder %s23, 5
      %s33 = sphi 0, %s35
      %s36 = sphi 0, %s33
      %s37 = sphi 0, %s36
      %s53 = sphi 0, %s37
      %s57 = sphi 0, %s57
      %s59 = sphi 0, %s57
      %s60 = sphi 0, %s59
      %s74 = sphi 0, %s60
      %s78 = sphi 0, %s78
      %s80 = sphi 0, %s78
      %s81 = sphi 0, %s80
      %s95 = sphi 0, %s81
      %s99 = sphi 0, %s99
      %s101 = sphi 0, %s99
      %s102 = sphi 0, %s101
      %s116 = sphi 0, %s102
      %s120 = sphi 0, %s120
      %s122 = sphi 0, %s120
      %s123 = sphi 0, %s122
      %s137 = sphi 0, %s123
      %s141 = sphi 0, %s141
      %s143 = sphi 0, %s141
      %s144 = sphi 0, %s143
      %s158 = sphi 0, %s144
      %s162 = sphi 0, %s162
      %s164 = sphi 0, %s162
      %s165 = sphi 0, %s164
      %s179 = sphi 0, %s165
      %s183 = sphi 0, %s183
      %s185 = sphi 0, %s183
      %s186 = sphi 0, %s185
      %s200 = sphi 0, %s186
      %s204 = sphi 0, %s204
      %s206 = sphi 0, %s204
      %s207 = sphi 0, %s206
      %s221 = sphi 0, %s207
      %s225 = sphi 0, %s225
      %s227 = sphi 0, %s225
      %s228 = sphi 0, %s227
      %s242 = sphi 0, %s228
      %s248 = sphi 0, %s250
      %s251 = sphi 0, %s248
      %s252 = sphi 0, %s251
      %s268 = sphi 0, %s252
      %s272 = sphi 0, %s272
      %s274 = sphi 0, %s272
      %s275 = sphi 0, %s274
      %s289 = sphi 0, %s275
      %s293 = sphi 0, %s293
      %s295 = sphi 0, %s293
      %s296 = sphi 0, %s295
      %s310 = sphi 0, %s296
    $region4: #{dsmil_b_forward.1} parent=1 // loop_header_branch
      %26 = sbr.rel (%p24) target = $region8
    $region5: #{dsmil_b_forward.1} parent=1 // loop_body
      %s28 = ssub.s32 %s23, 1
      %s29 = ssub.s32 %s23, 2
      %s30 = sadd.s32 %s23, 1
      %s31 = ssub.s32 %s23, %s30
      %p32 = scmp.eq.s32.totalorder %s31, 0
      %s34 = sadd.s32 %s33, 1
      %s35 = scalar_select %p32, %s33, %s34
      %p38 = pneg %p32
      %p39 = scmp.eq.s32.totalorder %s23, 2
      %p40 = por %p38, %p39
      %p41 = scmp.ne.s32.totalorder %s33, %s36
      %p42 = scmp.eq.s32.totalorder %s23, 0
      %p43 = por %p41, %p42
      %p44 = scmp.ne.s32.totalorder %s33, %s36
      %p45 = scmp.eq.s32.totalorder %s28, 2
      %p46 = por %p44, %p45
      %p47 = scmp.ne.s32.totalorder %s36, %s37
      %p48 = scmp.eq.s32.totalorder %s28, 0
      %p49 = por %p47, %p48
      %p50 = scmp.ne.s32.totalorder %s36, %s37
      %p51 = scmp.eq.s32.totalorder %s29, 2
      %p52 = por %p50, %p51
      %p54 = scmp.ne.s32.totalorder %s37, %s53
      %p55 = scmp.eq.s32.totalorder %s29, 0
      %p56 = por %p54, %p55
      %s58 = sadd.s32 %s57, 1
      %p61 = scmp.eq.s32.totalorder %s23, 2
      %p62 = scmp.ne.s32.totalorder %s57, %s59
      %p63 = scmp.eq.s32.totalorder %s23, 0
      %p64 = por %p62, %p63
      %p65 = scmp.ne.s32.totalorder %s57, %s59
      %p66 = scmp.eq.s32.totalorder %s28, 2
      %p67 = por %p65, %p66
      %p68 = scmp.ne.s32.totalorder %s59, %s60
      %p69 = scmp.eq.s32.totalorder %s28, 0
      %p70 = por %p68, %p69
      %p71 = scmp.ne.s32.totalorder %s59, %s60
      %p72 = scmp.eq.s32.totalorder %s29, 2
      %p73 = por %p71, %p72
      %p75 = scmp.ne.s32.totalorder %s60, %s74
      %p76 = scmp.eq.s32.totalorder %s29, 0
      %p77 = por %p75, %p76
      %s79 = sadd.s32 %s78, 1
      %p82 = scmp.eq.s32.totalorder %s23, 2
      %p83 = scmp.ne.s32.totalorder %s78, %s80
      %p84 = scmp.eq.s32.totalorder %s23, 0
      %p85 = por %p83, %p84
      %p86 = scmp.ne.s32.totalorder %s78, %s80
      %p87 = scmp.eq.s32.totalorder %s28, 2
      %p88 = por %p86, %p87
      %p89 = scmp.ne.s32.totalorder %s80, %s81
      %p90 = scmp.eq.s32.totalorder %s28, 0
      %p91 = por %p89, %p90
      %p92 = scmp.ne.s32.totalorder %s80, %s81
      %p93 = scmp.eq.s32.totalorder %s29, 2
      %p94 = por %p92, %p93
      %p96 = scmp.ne.s32.totalorder %s81, %s95
      %p97 = scmp.eq.s32.totalorder %s29, 0
      %p98 = por %p96, %p97
      %s100 = sadd.s32 %s99, 1
      %p103 = scmp.eq.s32.totalorder %s23, 2
      %p104 = scmp.ne.s32.totalorder %s99, %s101
      %p105 = scmp.eq.s32.totalorder %s23, 0
      %p106 = por %p104, %p105
      %p107 = scmp.ne.s32.totalorder %s99, %s101
      %p108 = scmp.eq.s32.totalorder %s28, 2
      %p109 = por %p107, %p108
      %p110 = scmp.ne.s32.totalorder %s101, %s102
      %p111 = scmp.eq.s32.totalorder %s28, 0
      %p112 = por %p110, %p111
      %p113 = scmp.ne.s32.totalorder %s101, %s102
      %p114 = scmp.eq.s32.totalorder %s29, 2
      %p115 = por %p113, %p114
      %p117 = scmp.ne.s32.totalorder %s102, %s116
      %p118 = scmp.eq.s32.totalorder %s29, 0
      %p119 = por %p117, %p118
      %s121 = sadd.s32 %s120, 1
      %p124 = scmp.eq.s32.totalorder %s23, 2
      %p125 = scmp.ne.s32.totalorder %s120, %s122
      %p126 = scmp.eq.s32.totalorder %s23, 0
      %p127 = por %p125, %p126
      %p128 = scmp.ne.s32.totalorder %s120, %s122
      %p129 = scmp.eq.s32.totalorder %s28, 2
      %p130 = por %p128, %p129
      %p131 = scmp.ne.s32.totalorder %s122, %s123
      %p132 = scmp.eq.s32.totalorder %s28, 0
      %p133 = por %p131, %p132
      %p134 = scmp.ne.s32.totalorder %s122, %s123
      %p135 = scmp.eq.s32.totalorder %s29, 2
      %p136 = por %p134, %p135
      %p138 = scmp.ne.s32.totalorder %s123, %s137
      %p139 = scmp.eq.s32.totalorder %s29, 0
      %p140 = por %p138, %p139
      %s142 = sadd.s32 %s141, 1
      %p145 = scmp.eq.s32.totalorder %s23, 2
      %p146 = scmp.ne.s32.totalorder %s141, %s143
      %p147 = scmp.eq.s32.totalorder %s23, 0
      %p148 = por %p146, %p147
      %p149 = scmp.ne.s32.totalorder %s141, %s143
      %p150 = scmp.eq.s32.totalorder %s28, 2
      %p151 = por %p149, %p150
      %p152 = scmp.ne.s32.totalorder %s143, %s144
      %p153 = scmp.eq.s32.totalorder %s28, 0
      %p154 = por %p152, %p153
      %p155 = scmp.ne.s32.totalorder %s143, %s144
      %p156 = scmp.eq.s32.totalorder %s29, 2
      %p157 = por %p155, %p156
      %p159 = scmp.ne.s32.totalorder %s144, %s158
      %p160 = scmp.eq.s32.totalorder %s29, 0
      %p161 = por %p159, %p160
      %s163 = sadd.s32 %s162, 1
      %p166 = scmp.eq.s32.totalorder %s23, 2
      %p167 = scmp.ne.s32.totalorder %s162, %s164
      %p168 = scmp.eq.s32.totalorder %s23, 0
      %p169 = por %p167, %p168
      %p170 = scmp.ne.s32.totalorder %s162, %s164
      %p171 = scmp.eq.s32.totalorder %s28, 2
      %p172 = por %p170, %p171
      %p173 = scmp.ne.s32.totalorder %s164, %s165
      %p174 = scmp.eq.s32.totalorder %s28, 0
      %p175 = por %p173, %p174
      %p176 = scmp.ne.s32.totalorder %s164, %s165
      %p177 = scmp.eq.s32.totalorder %s29, 2
      %p178 = por %p176, %p177
      %p180 = scmp.ne.s32.totalorder %s165, %s179
      %p181 = scmp.eq.s32.totalorder %s29, 0
      %p182 = por %p180, %p181
      %s184 = sadd.s32 %s183, 1
      %p187 = scmp.eq.s32.totalorder %s23, 2
      %p188 = scmp.ne.s32.totalorder %s183, %s185
      %p189 = scmp.eq.s32.totalorder %s23, 0
      %p190 = por %p188, %p189
      %p191 = scmp.ne.s32.totalorder %s183, %s185
      %p192 = scmp.eq.s32.totalorder %s28, 2
      %p193 = por %p191, %p192
      %p194 = scmp.ne.s32.totalorder %s185, %s186
      %p195 = scmp.eq.s32.totalorder %s28, 0
      %p196 = por %p194, %p195
      %p197 = scmp.ne.s32.totalorder %s185, %s186
      %p198 = scmp.eq.s32.totalorder %s29, 2
      %p199 = por %p197, %p198
      %p201 = scmp.ne.s32.totalorder %s186, %s200
      %p202 = scmp.eq.s32.totalorder %s29, 0
      %p203 = por %p201, %p202
      %s205 = sadd.s32 %s204, 1
      %p208 = scmp.eq.s32.totalorder %s23, 2
      %p209 = scmp.ne.s32.totalorder %s204, %s206
      %p210 = scmp.eq.s32.totalorder %s23, 0
      %p211 = por %p209, %p210
      %p212 = scmp.ne.s32.totalorder %s204, %s206
      %p213 = scmp.eq.s32.totalorder %s28, 2
      %p214 = por %p212, %p213
      %p215 = scmp.ne.s32.totalorder %s206, %s207
      %p216 = scmp.eq.s32.totalorder %s28, 0
      %p217 = por %p215, %p216
      %p218 = scmp.ne.s32.totalorder %s206, %s207
      %p219 = scmp.eq.s32.totalorder %s29, 2
      %p220 = por %p218, %p219
      %p222 = scmp.ne.s32.totalorder %s207, %s221
      %p223 = scmp.eq.s32.totalorder %s29, 0
      %p224 = por %p222, %p223
      %s226 = sadd.s32 %s225, 1
      %p229 = scmp.eq.s32.totalorder %s23, 2
      %p230 = scmp.ne.s32.totalorder %s225, %s227
      %p231 = scmp.eq.s32.totalorder %s23, 0
      %p232 = por %p230, %p231
      %p233 = scmp.ne.s32.totalorder %s225, %s227
      %p234 = scmp.eq.s32.totalorder %s28, 2
      %p235 = por %p233, %p234
      %p236 = scmp.ne.s32.totalorder %s227, %s228
      %p237 = scmp.eq.s32.totalorder %s28, 0
      %p238 = por %p236, %p237
      %p239 = scmp.ne.s32.totalorder %s227, %s228
      %p240 = scmp.eq.s32.totalorder %s29, 2
      %p241 = por %p239, %p240
      %p243 = scmp.ne.s32.totalorder %s228, %s242
      %p244 = scmp.eq.s32.totalorder %s29, 0
      %p245 = por %p243, %p244
      %s246 = ssub.s32 %s23, %s30
      %p247 = scmp.eq.s32.totalorder %s246, 0
      %s249 = sadd.s32 %s248, 1
      %s250 = scalar_select %p247, %s248, %s249
      %p253 = pneg %p247
      %p254 = scmp.eq.s32.totalorder %s23, 2
      %p255 = por %p253, %p254
      %p256 = scmp.ne.s32.totalorder %s248, %s251
      %p257 = scmp.eq.s32.totalorder %s23, 0
      %p258 = por %p256, %p257
      %p259 = scmp.ne.s32.totalorder %s248, %s251
      %p260 = scmp.eq.s32.totalorder %s28, 2
      %p261 = por %p259, %p260
      %p262 = scmp.ne.s32.totalorder %s251, %s252
      %p263 = scmp.eq.s32.totalorder %s28, 0
      %p264 = por %p262, %p263
      %p265 = scmp.ne.s32.totalorder %s251, %s252
      %p266 = scmp.eq.s32.totalorder %s29, 2
      %p267 = por %p265, %p266
      %p269 = scmp.ne.s32.totalorder %s252, %s268
      %p270 = scmp.eq.s32.totalorder %s29, 0
      %p271 = por %p269, %p270
      %s273 = sadd.s32 %s272, 1
      %p276 = scmp.eq.s32.totalorder %s23, 2
      %p277 = scmp.ne.s32.totalorder %s272, %s274
      %p278 = scmp.eq.s32.totalorder %s23, 0
      %p279 = por %p277, %p278
      %p280 = scmp.ne.s32.totalorder %s272, %s274
      %p281 = scmp.eq.s32.totalorder %s28, 2
      %p282 = por %p280, %p281
      %p283 = scmp.ne.s32.totalorder %s274, %s275
      %p284 = scmp.eq.s32.totalorder %s28, 0
      %p285 = por %p283, %p284
      %p286 = scmp.ne.s32.totalorder %s274, %s275
      %p287 = scmp.eq.s32.totalorder %s29, 2
      %p288 = por %p286, %p287
      %p290 = scmp.ne.s32.totalorder %s275, %s289
      %p291 = scmp.eq.s32.totalorder %s29, 0
      %p292 = por %p290, %p291
      %s294 = sadd.s32 %s293, 1
      %p297 = scmp.eq.s32.totalorder %s23, 2
      %p298 = scmp.ne.s32.totalorder %s293, %s295
      %p299 = scmp.eq.s32.totalorder %s23, 0
      %p300 = por %p298, %p299
      %p301 = scmp.ne.s32.totalorder %s293, %s295
      %p302 = scmp.eq.s32.totalorder %s28, 2
      %p303 = por %p301, %p302
      %p304 = scmp.ne.s32.totalorder %s295, %s296
      %p305 = scmp.eq.s32.totalorder %s28, 0
      %p306 = por %p304, %p305
      %p307 = scmp.ne.s32.totalorder %s295, %s296
      %p308 = scmp.eq.s32.totalorder %s29, 2
      %p309 = por %p307, %p308
      %p311 = scmp.ne.s32.totalorder %s296, %s310
      %p312 = scmp.eq.s32.totalorder %s29, 0
      %p313 = por %p311, %p312
      %p314 = scmp.le.s32.totalorder 1, %s23
      %p315 = scmp.lt.s32.totalorder %s23, 4
      %p316 = pnand %p314, %p315
      %p317 = pneg %p316
      // Predicated region
      $region9: #{dsmil_b_forward.1} parent=5 // pred_check
        _
      $region10: #{dsmil_b_forward.1} parent=5 // pred_check_branch
        %319 = sbr.rel (%p316) target = $region12
      $region11: #{dsmil_b_forward.1} parent=5 // pred_region
        %s320 = ssub.s32 %s23, 1
        // Predicated region
        $region13: #{dsmil_b_forward.1} parent=11 // pred_check
          %p321 = pneg %p70
        $region14: #{dsmil_b_forward.1} parent=11 // pred_check_branch
          %323 = sbr.rel (%p321) target = $region16
        $region15: #{dsmil_b_forward.1} parent=11 // pred_region
          _
        $region16: #{dsmil_b_forward.1} parent=11 // pred_fallthru
          _
        // Predicated region
        $region17: #{dsmil_b_forward.1} parent=11 // pred_check
          %p324 = pneg %p91
        $region18: #{dsmil_b_forward.1} parent=11 // pred_check_branch
          %326 = sbr.rel (%p324) target = $region20
        $region19: #{dsmil_b_forward.1} parent=11 // pred_region
          _
        $region20: #{dsmil_b_forward.1} parent=11 // pred_fallthru
          _
        // Predicated region
        $region21: #{dsmil_b_forward.1} parent=11 // pred_check
          %p327 = pneg %p112
        $region22: #{dsmil_b_forward.1} parent=11 // pred_check_branch
          %329 = sbr.rel (%p327) target = $region24
        $region23: #{dsmil_b_forward.1} parent=11 // pred_region
          _
        $region24: #{dsmil_b_forward.1} parent=11 // pred_fallthru
          _
        // Predicated region
        $region25: #{dsmil_b_forward.1} parent=11 // pred_check
          %p330 = pneg %p133
        $region26: #{dsmil_b_forward.1} parent=11 // pred_check_branch
          %332 = sbr.rel (%p330) target = $region28
        $region27: #{dsmil_b_forward.1} parent=11 // pred_region
          _
        $region28: #{dsmil_b_forward.1} parent=11 // pred_fallthru
          _
        // Predicated region
        $region29: #{dsmil_b_forward.1} parent=11 // pred_check
          %p333 = pneg %p154
        $region30: #{dsmil_b_forward.1} parent=11 // pred_check_branch
          %335 = sbr.rel (%p333) target = $region32
        $region31: #{dsmil_b_forward.1} parent=11 // pred_region
          _
        $region32: #{dsmil_b_forward.1} parent=11 // pred_fallthru
          _
        // Predicated region
        $region33: #{dsmil_b_forward.1} parent=11 // pred_check
          %p336 = pneg %p175
        $region34: #{dsmil_b_forward.1} parent=11 // pred_check_branch
          %338 = sbr.rel (%p336) target = $region36
        $region35: #{dsmil_b_forward.1} parent=11 // pred_region
          _
        $region36: #{dsmil_b_forward.1} parent=11 // pred_fallthru
          _
        // Predicated region
        $region37: #{dsmil_b_forward.1} parent=11 // pred_check
          %p339 = pneg %p196
        $region38: #{dsmil_b_forward.1} parent=11 // pred_check_branch
          %341 = sbr.rel (%p339) target = $region40
        $region39: #{dsmil_b_forward.1} parent=11 // pred_region
          _
        $region40: #{dsmil_b_forward.1} parent=11 // pred_fallthru
          _
        // Predicated region
        $region41: #{dsmil_b_forward.1} parent=11 // pred_check
          %p342 = pneg %p217
        $region42: #{dsmil_b_forward.1} parent=11 // pred_check_branch
          %344 = sbr.rel (%p342) target = $region44
        $region43: #{dsmil_b_forward.1} parent=11 // pred_region
          _
        $region44: #{dsmil_b_forward.1} parent=11 // pred_fallthru
          _
        // Predicated region
        $region45: #{dsmil_b_forward.1} parent=11 // pred_check
          %p345 = pneg %p238
        $region46: #{dsmil_b_forward.1} parent=11 // pred_check_branch
          %347 = sbr.rel (%p345) target = $region48
        $region47: #{dsmil_b_forward.1} parent=11 // pred_region
          _
        $region48: #{dsmil_b_forward.1} parent=11 // pred_fallthru
          _
      $region12: #{dsmil_b_forward.1} parent=5 // pred_fallthru
        _
      %p348 = scmp.lt.s32.totalorder %s23, 3
      // Predicated region
      $region49: #{dsmil_b_forward.1} parent=5 // pred_check
        %p349 = pneg %p348
      $region50: #{dsmil_b_forward.1} parent=5 // pred_check_branch
        %351 = sbr.rel (%p349) target = $region52
      $region51: #{dsmil_b_forward.1} parent=5 // pred_region
        // Predicated region
        $region53: #{dsmil_b_forward.1} parent=51 // pred_check
          %p352 = pneg %p43
        $region54: #{dsmil_b_forward.1} parent=51 // pred_check_branch
          %354 = sbr.rel (%p352) target = $region56
        $region55: #{dsmil_b_forward.1} parent=51 // pred_region
          %s355 = smul.u32 16, %s23
          %p356 = scmp.lt.s32.totalorder %s355, 47
          %s357 = scalar_select %p356, %s355, 47
          %s358 = smul.addr %s357, 4
          %s359 = scalar_lea.vmem %s1, %s358
          %s360 = smul.u32 16, %s23
        $region56: #{dsmil_b_forward.1} parent=51 // pred_fallthru
          _
      $region52: #{dsmil_b_forward.1} parent=5 // pred_fallthru
        _
      %p361 = scmp.le.s32.totalorder 1, %s23
      %p362 = scmp.lt.s32.totalorder %s23, 4
      %p363 = pnand %p361, %p362
      %p364 = pneg %p363
      // Predicated region
      $region57: #{dsmil_b_forward.1} parent=5 // pred_check
        _
      $region58: #{dsmil_b_forward.1} parent=5 // pred_check_branch
        %366 = sbr.rel (%p363) target = $region60
      $region59: #{dsmil_b_forward.1} parent=5 // pred_region
        %s367 = ssub.s32 %s23, 1
        %s368 = smul.u32 16, %s28
        %p369 = scmp.lt.s32.totalorder %s368, 47
        %s370 = scalar_select %p369, %s368, 47
        %s371 = smul.addr %s370, 4
        %s372 = scalar_lea.vmem %s1, %s371
        %p373 = pneg %p49
        %p374 = pneg %p46
        %p375 = pneg %p70
        %p376 = pneg %p67
        %p377 = pneg %p91
        %p378 = pneg %p88
        %p379 = pneg %p112
        %p380 = pneg %p109
        %p381 = pneg %p133
        %p382 = pneg %p130
        %p383 = pneg %p154
        %p384 = pneg %p151
        %p385 = pneg %p175
        %p386 = pneg %p172
        %p387 = pneg %p196
        %p388 = pneg %p193
        %p389 = pneg %p217
        %p390 = pneg %p214
        %p391 = pneg %p238
        %p392 = pneg %p235
        %p393 = pneg %p264
        %p394 = pneg %p261
        %s395 = sand.u32 %s251, 1
        %s396 = sand.u32 %s251, 1
        %s397 = smul.addr %s396, 128
        %s398 = scalar_lea.vmem [#allocation7], %s397
        %p399 = pneg %p285
        %p400 = pneg %p282
        %p401 = pneg %p306
        %p402 = pneg %p303
        %s403 = smul.u32 16, %s28
        %p404 = scmp.lt.s32.totalorder %s403, 47
        %s405 = scalar_select %p404, %s403, 47
        %s406 = smul.addr %s405, 4
        %s407 = scalar_lea.vmem %s1, %s406
        %s408 = smul.u32 16, %s28
        %p410 = scmp.eq.s32.totalorder %s28, 0
        // Predicated region
        $region61: #{dsmil_b_forward.1} parent=59 // pred_check
          %p411 = pneg %p410
        $region62: #{dsmil_b_forward.1} parent=59 // pred_check_branch
          %413 = sbr.rel (%p411) target = $region64
        $region63: #{dsmil_b_forward.1} parent=59 // pred_region
          %vm414 = vcmask 7168
          %415 = vst.msk [vmem:[#allocation2] sm:$0xff] %vm414, -inf
          %416 = vst.msk [vmem:[#allocation2 + $0x8] sm:$0xff] %vm414, -inf
          %417 = vst.msk [vmem:[#allocation2 + $0x10] sm:$0xff] %vm414, -inf
          %418 = vst.msk [vmem:[#allocation2 + $0x18] sm:$0xff] %vm414, -inf
          %419 = vst.msk [vmem:[#allocation2 + $0x20] sm:$0xff] %vm414, -inf
          %420 = vst.msk [vmem:[#allocation2 + $0x28] sm:$0xff] %vm414, -inf
          %421 = vst.msk [vmem:[#allocation2 + $0x30] sm:$0xff] %vm414, -inf
          %422 = vst.msk [vmem:[#allocation2 + $0x38] sm:$0xff] %vm414, -inf
          %423 = vst.msk [vmem:[#allocation2 + $0x40] sm:$0xff] %vm414, -inf
          %424 = vst.msk [vmem:[#allocation2 + $0x48] sm:$0xff] %vm414, -inf
          %425 = vst.msk [vmem:[#allocation2 + $0x50] sm:$0xff] %vm414, -inf
          %426 = vst.msk [vmem:[#allocation2 + $0x58] sm:$0xff] %vm414, -inf
          %427 = vst.msk [vmem:[#allocation2 + $0x60] sm:$0xff] %vm414, -inf
          %428 = vst.msk [vmem:[#allocation2 + $0x68] sm:$0xff] %vm414, -inf
          %429 = vst.msk [vmem:[#allocation2 + $0x70] sm:$0xff] %vm414, -inf
          %430 = vst.msk [vmem:[#allocation2 + $0x78] sm:$0xff] %vm414, -inf
          %431 = vst.msk [vmem:[#allocation3] sm:$0xff] %vm414, 0.0
          %432 = vst.msk [vmem:[#allocation3 + $0x8] sm:$0xff] %vm414, 0.0
          %433 = vst.msk [vmem:[#allocation3 + $0x10] sm:$0xff] %vm414, 0.0
          %434 = vst.msk [vmem:[#allocation3 + $0x18] sm:$0xff] %vm414, 0.0
          %435 = vst.msk [vmem:[#allocation3 + $0x20] sm:$0xff] %vm414, 0.0
          %436 = vst.msk [vmem:[#allocation3 + $0x28] sm:$0xff] %vm414, 0.0
          %437 = vst.msk [vmem:[#allocation3 + $0x30] sm:$0xff] %vm414, 0.0
          %438 = vst.msk [vmem:[#allocation3 + $0x38] sm:$0xff] %vm414, 0.0
          %439 = vst.msk [vmem:[#allocation3 + $0x40] sm:$0xff] %vm414, 0.0
          %440 = vst.msk [vmem:[#allocation3 + $0x48] sm:$0xff] %vm414, 0.0
          %441 = vst.msk [vmem:[#allocation3 + $0x50] sm:$0xff] %vm414, 0.0
          %442 = vst.msk [vmem:[#allocation3 + $0x58] sm:$0xff] %vm414, 0.0
          %443 = vst.msk [vmem:[#allocation3 + $0x60] sm:$0xff] %vm414, 0.0
          %444 = vst.msk [vmem:[#allocation3 + $0x68] sm:$0xff] %vm414, 0.0
          %445 = vst.msk [vmem:[#allocation3 + $0x70] sm:$0xff] %vm414, 0.0
          %446 = vst.msk [vmem:[#allocation3 + $0x78] sm:$0xff] %vm414, 0.0
          %447 = vst [vmem:[#allocation4] sm:$0xff] 0.0
          %448 = vst [vmem:[#allocation4 + $0x8] sm:$0xff] 0.0
          %449 = vst [vmem:[#allocation4 + $0x10] sm:$0xff] 0.0
          %450 = vst [vmem:[#allocation4 + $0x18] sm:$0xff] 0.0
          %451 = vst [vmem:[#allocation4 + $0x20] sm:$0xff] 0.0
          %452 = vst [vmem:[#allocation4 + $0x28] sm:$0xff] 0.0
          %453 = vst [vmem:[#allocation4 + $0x30] sm:$0xff] 0.0
          %454 = vst [vmem:[#allocation4 + $0x38] sm:$0xff] 0.0
          %455 = vst [vmem:[#allocation4 + $0x40] sm:$0xff] 0.0
          %456 = vst [vmem:[#allocation4 + $0x48] sm:$0xff] 0.0
          %457 = vst [vmem:[#allocation4 + $0x50] sm:$0xff] 0.0
          %458 = vst [vmem:[#allocation4 + $0x58] sm:$0xff] 0.0
          %459 = vst [vmem:[#allocation4 + $0x60] sm:$0xff] 0.0
          %460 = vst [vmem:[#allocation4 + $0x68] sm:$0xff] 0.0
          %461 = vst [vmem:[#allocation4 + $0x70] sm:$0xff] 0.0
          %462 = vst [vmem:[#allocation4 + $0x78] sm:$0xff] 0.0
        $region64: #{dsmil_b_forward.1} parent=59 // pred_fallthru
          _
        %v463 = vld [vmem:[%s407] sm:$0xf]
        %v464 = vld [vmem:[%s407 + $0x4] sm:$0xf]
        %v465 = vld [vmem:[%s407 + $0x8] sm:$0xf]
        %v466 = vld [vmem:[%s407 + $0xc] sm:$0xf]
        %v467 = vld [vmem:[%s407 + $0x10] sm:$0xf]
        %v468 = vld [vmem:[%s407 + $0x14] sm:$0xf]
        %v469 = vld [vmem:[%s407 + $0x18] sm:$0xf]
        %v470 = vld [vmem:[%s407 + $0x1c] sm:$0xf]
        %v471 = vld [vmem:[%s407 + $0x20] sm:$0xf]
        %v472 = vld [vmem:[%s407 + $0x24] sm:$0xf]
        %v473 = vld [vmem:[%s407 + $0x28] sm:$0xf]
        %v474 = vld [vmem:[%s407 + $0x2c] sm:$0xf]
        %v475 = vld [vmem:[%s407 + $0x30] sm:$0xf]
        %v476 = vld [vmem:[%s407 + $0x34] sm:$0xf]
        %v477 = vld [vmem:[%s407 + $0x38] sm:$0xf]
        %v478 = vld [vmem:[%s407 + $0x3c] sm:$0xf]
        %v479 = vld [vmem:[%s3] sm:$0xf]
        %v480 = vld [vmem:[%s3 + $0x4] sm:$0xf]
        %v481 = vld [vmem:[%s3 + $0x8] sm:$0xf]
        %v482 = vld [vmem:[%s3 + $0xc] sm:$0xf]
        %v483 = vld [vmem:[%s3 + $0x10] sm:$0xf]
        %v484 = vld [vmem:[%s3 + $0x14] sm:$0xf]
        %v485 = vld [vmem:[%s3 + $0x18] sm:$0xf]
        %v486 = vld [vmem:[%s3 + $0x1c] sm:$0xf]
        %v487 = vld [vmem:[%s3 + $0x20] sm:$0xf]
        %v488 = vld [vmem:[%s3 + $0x24] sm:$0xf]
        %v489 = vld [vmem:[%s3 + $0x28] sm:$0xf]
        %v490 = vld [vmem:[%s3 + $0x2c] sm:$0xf]
        %v491 = vld [vmem:[%s3 + $0x30] sm:$0xf]
        %v492 = vld [vmem:[%s3 + $0x34] sm:$0xf]
        %v493 = vld [vmem:[%s3 + $0x38] sm:$0xf]
        %v494 = vld [vmem:[%s3 + $0x3c] sm:$0xf]
        %v495 = vld [vmem:[%s4] sm:$0x1]
        %v497 = vperm.slane %v495, 0
        %v515 = vunpack.c.l.b16 %v463
        %v516 = vunpack.c.l.b16 %v464
        %v517 = vunpack.c.l.b16 %v465
        %v518 = vunpack.c.l.b16 %v466
        %v519 = vunpack.c.l.b16 %v467
        %v520 = vunpack.c.l.b16 %v468
        %v521 = vunpack.c.l.b16 %v469
        %v522 = vunpack.c.l.b16 %v470
        %v523 = vunpack.c.l.b16 %v471
        %v524 = vunpack.c.l.b16 %v472
        %v525 = vunpack.c.l.b16 %v473
        %v526 = vunpack.c.l.b16 %v474
        %v527 = vunpack.c.l.b16 %v475
        %v528 = vunpack.c.l.b16 %v476
        %v529 = vunpack.c.l.b16 %v477
        %v530 = vunpack.c.l.b16 %v478
        %v531 = vpack.c.b16 %v516, %v515
        %v532 = vpack.c.b16 %v518, %v517
        %v533 = vpack.c.b16 %v520, %v519
        %v534 = vpack.c.b16 %v522, %v521
        %v535 = vpack.c.b16 %v524, %v523
        %v536 = vpack.c.b16 %v526, %v525
        %v537 = vpack.c.b16 %v528, %v527
        %v538 = vpack.c.b16 %v530, %v529
        %v563 = vunpack.c.l.b16 %v479
        %v564 = vunpack.c.l.b16 %v480
        %v565 = vunpack.c.l.b16 %v481
        %v566 = vunpack.c.l.b16 %v482
        %v567 = vunpack.c.l.b16 %v483
        %v568 = vunpack.c.l.b16 %v484
        %v569 = vunpack.c.l.b16 %v485
        %v570 = vunpack.c.l.b16 %v486
        %v571 = vunpack.c.l.b16 %v487
        %v572 = vunpack.c.l.b16 %v488
        %v573 = vunpack.c.l.b16 %v489
        %v574 = vunpack.c.l.b16 %v490
        %v575 = vunpack.c.l.b16 %v491
        %v576 = vunpack.c.l.b16 %v492
        %v577 = vunpack.c.l.b16 %v493
        %v578 = vunpack.c.l.b16 %v494
        %v579 = vpack.c.b16 %v564, %v563
        %v580 = vpack.c.b16 %v566, %v565
        %v581 = vpack.c.b16 %v568, %v567
        %v582 = vpack.c.b16 %v570, %v569
        %v583 = vpack.c.b16 %v572, %v571
        %v584 = vpack.c.b16 %v574, %v573
        %v585 = vpack.c.b16 %v576, %v575
        %v586 = vpack.c.b16 %v578, %v577
        %595 = vmatpush.bf16.msra.mxu0 %v586
        %596 = vmatpush.bf16.msra.mxu0 %v585
        %597 = vmatpush.bf16.msra.mxu0 %v584
        %598 = vmatpush.bf16.msra.mxu0 %v583
        %599 = vmatpush.bf16.msra.mxu0 %v582
        %600 = vmatpush.bf16.msra.mxu0 %v581
        %601 = vmatpush.bf16.msra.mxu0 %v580
        %602 = vmatpush.bf16.msra.mxu0 %v579
        %603 = vmatmul.bf16.gmra.mxu0 %v531
        %v604 = vpop.f32.mrf.mxu0
        %v605 = vadd.f32 %v497, %v604
        %v606 = vpop.f32.mrf.mxu0
        %v607 = vadd.f32 %v497, %v606
        %608 = vmatmul.bf16.gmra.mxu0 %v532
        %v609 = vpop.f32.mrf.mxu0
        %v610 = vadd.f32 %v497, %v609
        %v611 = vpop.f32.mrf.mxu0
        %v612 = vadd.f32 %v497, %v611
        %613 = vmatmul.bf16.gmra.mxu0 %v533
        %v614 = vpop.f32.mrf.mxu0
        %v615 = vadd.f32 %v497, %v614
        %v616 = vpop.f32.mrf.mxu0
        %v617 = vadd.f32 %v497, %v616
        %618 = vmatmul.bf16.gmra.mxu0 %v534
        %v619 = vpop.f32.mrf.mxu0
        %v620 = vadd.f32 %v497, %v619
        %v621 = vpop.f32.mrf.mxu0
        %v622 = vadd.f32 %v497, %v621
        %623 = vmatmul.bf16.gmra.mxu0 %v535
        %v624 = vpop.f32.mrf.mxu0
        %v625 = vadd.f32 %v497, %v624
        %v626 = vpop.f32.mrf.mxu0
        %v627 = vadd.f32 %v497, %v626
        %628 = vmatmul.bf16.gmra.mxu0 %v536
        %v629 = vpop.f32.mrf.mxu0
        %v630 = vadd.f32 %v497, %v629
        %v631 = vpop.f32.mrf.mxu0
        %v632 = vadd.f32 %v497, %v631
        %633 = vmatmul.bf16.gmra.mxu0 %v537
        %v634 = vpop.f32.mrf.mxu0
        %v635 = vadd.f32 %v497, %v634
        %v636 = vpop.f32.mrf.mxu0
        %v637 = vadd.f32 %v497, %v636
        %638 = vmatmul.bf16.gmra.mxu0 %v538
        %v639 = vpop.f32.mrf.mxu0
        %v640 = vadd.f32 %v497, %v639
        %v641 = vpop.f32.mrf.mxu0
        %v642 = vadd.f32 %v497, %v641
        %643 = vdwg.mxu0
        %v644 = vmax.f32 %v605, 0.0
        %v645 = vmax.f32 %v607, 0.0
        %v646 = vmax.f32 %v610, 0.0
        %v647 = vmax.f32 %v612, 0.0
        %v648 = vmax.f32 %v615, 0.0
        %v649 = vmax.f32 %v617, 0.0
        %v650 = vmax.f32 %v620, 0.0
        %v651 = vmax.f32 %v622, 0.0
        %v652 = vmax.f32 %v625, 0.0
        %v653 = vmax.f32 %v627, 0.0
        %v654 = vmax.f32 %v630, 0.0
        %v655 = vmax.f32 %v632, 0.0
        %v656 = vmax.f32 %v635, 0.0
        %v657 = vmax.f32 %v637, 0.0
        %v658 = vmax.f32 %v640, 0.0
        %v659 = vmax.f32 %v642, 0.0
        %v660 = vld [vmem:[%s5] sm:$0xf]
        %v661 = vld [vmem:[%s5 + $0x4] sm:$0xf]
        %v662 = vld [vmem:[%s5 + $0x8] sm:$0xf]
        %v663 = vld [vmem:[%s5 + $0xc] sm:$0xf]
        %v664 = vld [vmem:[%s5 + $0x10] sm:$0xf]
        %v665 = vld [vmem:[%s5 + $0x14] sm:$0xf]
        %v666 = vld [vmem:[%s5 + $0x18] sm:$0xf]
        %v667 = vld [vmem:[%s5 + $0x1c] sm:$0xf]
        %v668 = vld [vmem:[%s5 + $0x20] sm:$0xf]
        %v669 = vld [vmem:[%s5 + $0x24] sm:$0xf]
        %v670 = vld [vmem:[%s5 + $0x28] sm:$0xf]
        %v671 = vld [vmem:[%s5 + $0x2c] sm:$0xf]
        %v672 = vld [vmem:[%s5 + $0x30] sm:$0xf]
        %v673 = vld [vmem:[%s5 + $0x34] sm:$0xf]
        %v674 = vld [vmem:[%s5 + $0x38] sm:$0xf]
        %v675 = vld [vmem:[%s5 + $0x3c] sm:$0xf]
        %v676 = vld [vmem:[%s6] sm:$0x1]
        %v678 = vperm.slane %v676, 0
        %v696 = vunpack.c.l.b16 %v660
        %v697 = vunpack.c.l.b16 %v661
        %v698 = vunpack.c.l.b16 %v662
        %v699 = vunpack.c.l.b16 %v663
        %v700 = vunpack.c.l.b16 %v664
        %v701 = vunpack.c.l.b16 %v665
        %v702 = vunpack.c.l.b16 %v666
        %v703 = vunpack.c.l.b16 %v667
        %v704 = vunpack.c.l.b16 %v668
        %v705 = vunpack.c.l.b16 %v669
        %v706 = vunpack.c.l.b16 %v670
        %v707 = vunpack.c.l.b16 %v671
        %v708 = vunpack.c.l.b16 %v672
        %v709 = vunpack.c.l.b16 %v673
        %v710 = vunpack.c.l.b16 %v674
        %v711 = vunpack.c.l.b16 %v675
        %v712 = vpack.c.b16 %v697, %v696
        %v713 = vpack.c.b16 %v699, %v698
        %v714 = vpack.c.b16 %v701, %v700
        %v715 = vpack.c.b16 %v703, %v702
        %v716 = vpack.c.b16 %v705, %v704
        %v717 = vpack.c.b16 %v707, %v706
        %v718 = vpack.c.b16 %v709, %v708
        %v719 = vpack.c.b16 %v711, %v710
        %728 = vmatpush.bf16.msra.mxu0 %v719
        %729 = vmatpush.bf16.msra.mxu0 %v718
        %730 = vmatpush.bf16.msra.mxu0 %v717
        %731 = vmatpush.bf16.msra.mxu0 %v716
        %732 = vmatpush.bf16.msra.mxu0 %v715
        %733 = vmatpush.bf16.msra.mxu0 %v714
        %734 = vmatpush.bf16.msra.mxu0 %v713
        %735 = vmatpush.bf16.msra.mxu0 %v712
        %736 = vmatmul.bf16.gmra.mxu0 %v531
        %v737 = vpop.f32.mrf.mxu0
        %v738 = vadd.f32 %v678, %v737
        %v739 = vpop.f32.mrf.mxu0
        %v740 = vadd.f32 %v678, %v739
        %741 = vmatmul.bf16.gmra.mxu0 %v532
        %v742 = vpop.f32.mrf.mxu0
        %v743 = vadd.f32 %v678, %v742
        %v744 = vpop.f32.mrf.mxu0
        %v745 = vadd.f32 %v678, %v744
        %746 = vmatmul.bf16.gmra.mxu0 %v533
        %v747 = vpop.f32.mrf.mxu0
        %v748 = vadd.f32 %v678, %v747
        %v749 = vpop.f32.mrf.mxu0
        %v750 = vadd.f32 %v678, %v749
        %751 = vmatmul.bf16.gmra.mxu0 %v534
        %v752 = vpop.f32.mrf.mxu0
        %v753 = vadd.f32 %v678, %v752
        %v754 = vpop.f32.mrf.mxu0
        %v755 = vadd.f32 %v678, %v754
        %756 = vmatmul.bf16.gmra.mxu0 %v535
        %v757 = vpop.f32.mrf.mxu0
        %v758 = vadd.f32 %v678, %v757
        %v759 = vpop.f32.mrf.mxu0
        %v760 = vadd.f32 %v678, %v759
        %761 = vmatmul.bf16.gmra.mxu0 %v536
        %v762 = vpop.f32.mrf.mxu0
        %v763 = vadd.f32 %v678, %v762
        %v764 = vpop.f32.mrf.mxu0
        %v765 = vadd.f32 %v678, %v764
        %766 = vmatmul.bf16.gmra.mxu0 %v537
        %v767 = vpop.f32.mrf.mxu0
        %v768 = vadd.f32 %v678, %v767
        %v769 = vpop.f32.mrf.mxu0
        %v770 = vadd.f32 %v678, %v769
        %771 = vmatmul.bf16.gmra.mxu0 %v538
        %v772 = vpop.f32.mrf.mxu0
        %v773 = vadd.f32 %v678, %v772
        %v774 = vpop.f32.mrf.mxu0
        %v775 = vadd.f32 %v678, %v774
        %776 = vdwg.mxu0
        %v777 = vmax.f32 %v738, 0.0
        %v778 = vmax.f32 %v740, 0.0
        %v779 = vmax.f32 %v743, 0.0
        %v780 = vmax.f32 %v745, 0.0
        %v781 = vmax.f32 %v748, 0.0
        %v782 = vmax.f32 %v750, 0.0
        %v783 = vmax.f32 %v753, 0.0
        %v784 = vmax.f32 %v755, 0.0
        %v785 = vmax.f32 %v758, 0.0
        %v786 = vmax.f32 %v760, 0.0
        %v787 = vmax.f32 %v763, 0.0
        %v788 = vmax.f32 %v765, 0.0
        %v789 = vmax.f32 %v768, 0.0
        %v790 = vmax.f32 %v770, 0.0
        %v791 = vmax.f32 %v773, 0.0
        %v792 = vmax.f32 %v775, 0.0
        %v793 = vpack.c.bf16 %v778, %v777
        %v794 = vpack.c.bf16 %v780, %v779
        %v795 = vpack.c.bf16 %v782, %v781
        %v796 = vpack.c.bf16 %v784, %v783
        %v797 = vpack.c.bf16 %v786, %v785
        %v798 = vpack.c.bf16 %v788, %v787
        %v799 = vpack.c.bf16 %v790, %v789
        %v800 = vpack.c.bf16 %v792, %v791
        %v801 = vld [vmem:[%s7] sm:$0xf]
        %v802 = vld [vmem:[%s7 + $0x4] sm:$0xf]
        %v803 = vld [vmem:[%s7 + $0x8] sm:$0xf]
        %v804 = vld [vmem:[%s7 + $0xc] sm:$0xf]
        %v805 = vld [vmem:[%s7 + $0x10] sm:$0xf]
        %v806 = vld [vmem:[%s7 + $0x14] sm:$0xf]
        %v807 = vld [vmem:[%s7 + $0x18] sm:$0xf]
        %v808 = vld [vmem:[%s7 + $0x1c] sm:$0xf]
        %v809 = vld [vmem:[%s8] sm:$0x1]
        %v811 = vperm.slane %v809, 0
        %v821 = vunpack.c.l.b16 %v801
        %v822 = vunpack.c.l.b16 %v802
        %v823 = vunpack.c.l.b16 %v803
        %v824 = vunpack.c.l.b16 %v804
        %v825 = vunpack.c.l.b16 %v805
        %v826 = vunpack.c.l.b16 %v806
        %v827 = vunpack.c.l.b16 %v807
        %v828 = vunpack.c.l.b16 %v808
        %v829 = vpack.c.b16 %v822, %v821
        %v830 = vpack.c.b16 %v824, %v823
        %v831 = vpack.c.b16 %v826, %v825
        %v832 = vpack.c.b16 %v828, %v827
        %vm837 = vcmask 523264
        %v839 = vsel %vm837, %v793, 0
        %v842 = vsel %vm837, %v794, 0
        %v845 = vsel %vm837, %v795, 0
        %v848 = vsel %vm837, %v796, 0
        %v851 = vsel %vm837, %v797, 0
        %v854 = vsel %vm837, %v798, 0
        %v857 = vsel %vm837, %v799, 0
        %v860 = vsel %vm837, %v800, 0
        %862 = vmatpush.bf16.msra.mxu0 0
        %863 = vmatpush.bf16.msra.mxu0 0
        %864 = vmatpush.bf16.msra.mxu0 0
        %865 = vmatpush.bf16.msra.mxu0 0
        %866 = vmatpush.bf16.msra.mxu0 %v832
        %867 = vmatpush.bf16.msra.mxu0 %v831
        %868 = vmatpush.bf16.msra.mxu0 %v830
        %869 = vmatpush.bf16.msra.mxu0 %v829
        %870 = vmatmul.bf16.gmra.mxu0 %v839
        %v871 = vpop.f32.mrf.mxu0
        %v872 = vadd.f32 %v811, %v871
        %v873 = vpop.f32.mrf.mxu0
        %v874 = vadd.f32 %v811, %v873
        %875 = vmatmul.bf16.gmra.mxu0 %v842
        %v876 = vpop.f32.mrf.mxu0
        %v877 = vadd.f32 %v811, %v876
        %v878 = vpop.f32.mrf.mxu0
        %v879 = vadd.f32 %v811, %v878
        %880 = vmatmul.bf16.gmra.mxu0 %v845
        %v881 = vpop.f32.mrf.mxu0
        %v882 = vadd.f32 %v811, %v881
        %v883 = vpop.f32.mrf.mxu0
        %v884 = vadd.f32 %v811, %v883
        %885 = vmatmul.bf16.gmra.mxu0 %v848
        %v886 = vpop.f32.mrf.mxu0
        %v887 = vadd.f32 %v811, %v886
        %v888 = vpop.f32.mrf.mxu0
        %v889 = vadd.f32 %v811, %v888
        %890 = vmatmul.bf16.gmra.mxu0 %v851
        %v891 = vpop.f32.mrf.mxu0
        %v892 = vadd.f32 %v811, %v891
        %v893 = vpop.f32.mrf.mxu0
        %v894 = vadd.f32 %v811, %v893
        %895 = vmatmul.bf16.gmra.mxu0 %v854
        %v896 = vpop.f32.mrf.mxu0
        %v897 = vadd.f32 %v811, %v896
        %v898 = vpop.f32.mrf.mxu0
        %v899 = vadd.f32 %v811, %v898
        %900 = vmatmul.bf16.gmra.mxu0 %v857
        %v901 = vpop.f32.mrf.mxu0
        %v902 = vadd.f32 %v811, %v901
        %v903 = vpop.f32.mrf.mxu0
        %v904 = vadd.f32 %v811, %v903
        %905 = vmatmul.bf16.gmra.mxu0 %v860
        %v906 = vpop.f32.mrf.mxu0
        %v907 = vadd.f32 %v811, %v906
        %v908 = vpop.f32.mrf.mxu0
        %v909 = vadd.f32 %v811, %v908
        %910 = vdwg.mxu0
        %v911 = vtanh.pop %v872
        %v912 = vtanh.pop %v874
        %v913 = vtanh.pop %v877
        %v914 = vtanh.pop %v879
        %v915 = vtanh.pop %v882
        %v916 = vtanh.pop %v884
        %v917 = vtanh.pop %v887
        %v918 = vtanh.pop %v889
        %v919 = vtanh.pop %v892
        %v920 = vtanh.pop %v894
        %v921 = vtanh.pop %v897
        %v922 = vtanh.pop %v899
        %v923 = vtanh.pop %v902
        %v924 = vtanh.pop %v904
        %v925 = vtanh.pop %v907
        %v926 = vtanh.pop %v909
        %v927 = vld [vmem:[%s2] sm:$0xff]
        %v928 = vld [vmem:[%s2 + $0x8] sm:$0xff]
        %v929 = vld [vmem:[%s2 + $0x10] sm:$0xff]
        %v930 = vld [vmem:[%s2 + $0x18] sm:$0xff]
        %v931 = vld [vmem:[%s2 + $0x20] sm:$0xff]
        %v932 = vld [vmem:[%s2 + $0x28] sm:$0xff]
        %v933 = vld [vmem:[%s2 + $0x30] sm:$0xff]
        %v934 = vld [vmem:[%s2 + $0x38] sm:$0xff]
        %v935 = vld [vmem:[%s2 + $0x40] sm:$0xff]
        %v936 = vld [vmem:[%s2 + $0x48] sm:$0xff]
        %v937 = vld [vmem:[%s2 + $0x50] sm:$0xff]
        %v938 = vld [vmem:[%s2 + $0x58] sm:$0xff]
        %v939 = vld [vmem:[%s2 + $0x60] sm:$0xff]
        %v940 = vld [vmem:[%s2 + $0x68] sm:$0xff]
        %v941 = vld [vmem:[%s2 + $0x70] sm:$0xff]
        %v942 = vld [vmem:[%s2 + $0x78] sm:$0xff]
        %v944 = vsel %vm837, %v927, 0
        %v947 = vsel %vm837, %v928, 0
        %v950 = vsel %vm837, %v929, 0
        %v953 = vsel %vm837, %v930, 0
        %v956 = vsel %vm837, %v931, 0
        %v959 = vsel %vm837, %v932, 0
        %v962 = vsel %vm837, %v933, 0
        %v965 = vsel %vm837, %v934, 0
        %v968 = vsel %vm837, %v935, 0
        %v971 = vsel %vm837, %v936, 0
        %v974 = vsel %vm837, %v937, 0
        %v977 = vsel %vm837, %v938, 0
        %v980 = vsel %vm837, %v939, 0
        %v983 = vsel %vm837, %v940, 0
        %v986 = vsel %vm837, %v941, 0
        %v989 = vsel %vm837, %v942, 0
        %v992 = vsel %vm837, %v911, 0
        %v995 = vsel %vm837, %v912, 0
        %v998 = vsel %vm837, %v913, 0
        %v1001 = vsel %vm837, %v914, 0
        %v1004 = vsel %vm837, %v915, 0
        %v1007 = vsel %vm837, %v916, 0
        %v1010 = vsel %vm837, %v917, 0
        %v1013 = vsel %vm837, %v918, 0
        %v1016 = vsel %vm837, %v919, 0
        %v1019 = vsel %vm837, %v920, 0
        %v1022 = vsel %vm837, %v921, 0
        %v1025 = vsel %vm837, %v922, 0
        %v1028 = vsel %vm837, %v923, 0
        %v1031 = vsel %vm837, %v924, 0
        %v1034 = vsel %vm837, %v925, 0
        %v1037 = vsel %vm837, %v926, 0
        %1039 = vmatpush.xpose.msra.mxu0 %v1037
        %1040 = vmatpush.xpose.msra.mxu0 %v1034
        %1041 = vmatpush.xpose.msra.mxu0 %v1031
        %1042 = vmatpush.xpose.msra.mxu0 %v1028
        %1043 = vmatpush.xpose.msra.mxu0 %v1025
        %1044 = vmatpush.xpose.msra.mxu0 %v1022
        %1045 = vmatpush.xpose.msra.mxu0 %v1019
        %1046 = vmatpush.xpose.msra.mxu0 %v1016
        %1047 = vmatpush.xpose.msra.mxu0 %v1013
        %1048 = vmatpush.xpose.msra.mxu0 %v1010
        %1049 = vmatpush.xpose.msra.mxu0 %v1007
        %1050 = vmatpush.xpose.msra.mxu0 %v1004
        %1051 = vmatpush.xpose.msra.mxu0 %v1001
        %1052 = vmatpush.xpose.msra.mxu0 %v998
        %1053 = vmatpush.xpose.msra.mxu0 %v995
        %1054 = vmatpush.xpose.msra.mxu0 %v992
        %1055 = vmatmul.f32.gmra.mxu0 %v944
        %v1056 = vpop.f32.mrf.mxu0
        %v1057 = vadd.f32 0.0, %v1056
        %1058 = vmatmul.f32.gmra.mxu0 %v947
        %v1059 = vpop.f32.mrf.mxu0
        %v1060 = vadd.f32 0.0, %v1059
        %1061 = vmatmul.f32.gmra.mxu0 %v950
        %v1062 = vpop.f32.mrf.mxu0
        %v1063 = vadd.f32 0.0, %v1062
        %1064 = vmatmul.f32.gmra.mxu0 %v953
        %v1065 = vpop.f32.mrf.mxu0
        %v1066 = vadd.f32 0.0, %v1065
        %1067 = vmatmul.f32.gmra.mxu0 %v956
        %v1068 = vpop.f32.mrf.mxu0
        %v1069 = vadd.f32 0.0, %v1068
        %1070 = vmatmul.f32.gmra.mxu0 %v959
        %v1071 = vpop.f32.mrf.mxu0
        %v1072 = vadd.f32 0.0, %v1071
        %1073 = vmatmul.f32.gmra.mxu0 %v962
        %v1074 = vpop.f32.mrf.mxu0
        %v1075 = vadd.f32 0.0, %v1074
        %1076 = vmatmul.f32.gmra.mxu0 %v965
        %v1077 = vpop.f32.mrf.mxu0
        %v1078 = vadd.f32 0.0, %v1077
        %1079 = vmatmul.f32.gmra.mxu0 %v968
        %v1080 = vpop.f32.mrf.mxu0
        %v1081 = vadd.f32 0.0, %v1080
        %1082 = vmatmul.f32.gmra.mxu0 %v971
        %v1083 = vpop.f32.mrf.mxu0
        %v1084 = vadd.f32 0.0, %v1083
        %1085 = vmatmul.f32.gmra.mxu0 %v974
        %v1086 = vpop.f32.mrf.mxu0
        %v1087 = vadd.f32 0.0, %v1086
        %1088 = vmatmul.f32.gmra.mxu0 %v977
        %v1089 = vpop.f32.mrf.mxu0
        %v1090 = vadd.f32 0.0, %v1089
        %1091 = vmatmul.f32.gmra.mxu0 %v980
        %v1092 = vpop.f32.mrf.mxu0
        %v1093 = vadd.f32 0.0, %v1092
        %1094 = vmatmul.f32.gmra.mxu0 %v983
        %v1095 = vpop.f32.mrf.mxu0
        %v1096 = vadd.f32 0.0, %v1095
        %1097 = vmatmul.f32.gmra.mxu0 %v986
        %v1098 = vpop.f32.mrf.mxu0
        %v1099 = vadd.f32 0.0, %v1098
        %1100 = vmatmul.f32.gmra.mxu0 %v989
        %v1101 = vpop.f32.mrf.mxu0
        %v1102 = vadd.f32 0.0, %v1101
        %1103 = vdwg.mxu0
        %s1104 = smul.u32 %s28, 128
        %v1105 = vlaneseq
        %v1106 = vand.u32 %v1105, 127
        %v1107 = vstv %s1104
        %v1108 = vadd.s32 %v1107, %v1106
        %s1109 = sld [smem:[#allocation6]]
        %v1110 = vstv %s1109
        %vm1111 = vcmp.lt.s32.totalorder %v1108, %v1110
        %v1112 = vsel %vm1111, %v1057, -inf
        %v1113 = vsel %vm1111, %v1060, -inf
        %v1114 = vsel %vm1111, %v1063, -inf
        %v1115 = vsel %vm1111, %v1066, -inf
        %v1116 = vsel %vm1111, %v1069, -inf
        %v1117 = vsel %vm1111, %v1072, -inf
        %v1118 = vsel %vm1111, %v1075, -inf
        %v1119 = vsel %vm1111, %v1078, -inf
        %v1120 = vsel %vm1111, %v1081, -inf
        %v1121 = vsel %vm1111, %v1084, -inf
        %v1122 = vsel %vm1111, %v1087, -inf
        %v1123 = vsel %vm1111, %v1090, -inf
        %v1124 = vsel %vm1111, %v1093, -inf
        %v1125 = vsel %vm1111, %v1096, -inf
        %v1126 = vsel %vm1111, %v1099, -inf
        %v1127 = vsel %vm1111, %v1102, -inf
        %1128 = vst [vmem:[%s398] sm:$0xff] %v1112
        %1129 = vst [vmem:[%s398 + $0x8] sm:$0xff] %v1113
        %1130 = vst [vmem:[%s398 + $0x10] sm:$0xff] %v1114
        %1131 = vst [vmem:[%s398 + $0x18] sm:$0xff] %v1115
        %1132 = vst [vmem:[%s398 + $0x20] sm:$0xff] %v1116
        %1133 = vst [vmem:[%s398 + $0x28] sm:$0xff] %v1117
        %1134 = vst [vmem:[%s398 + $0x30] sm:$0xff] %v1118
        %1135 = vst [vmem:[%s398 + $0x38] sm:$0xff] %v1119
        %1136 = vst [vmem:[%s398 + $0x40] sm:$0xff] %v1120
        %1137 = vst [vmem:[%s398 + $0x48] sm:$0xff] %v1121
        %1138 = vst [vmem:[%s398 + $0x50] sm:$0xff] %v1122
        %1139 = vst [vmem:[%s398 + $0x58] sm:$0xff] %v1123
        %1140 = vst [vmem:[%s398 + $0x60] sm:$0xff] %v1124
        %1141 = vst [vmem:[%s398 + $0x68] sm:$0xff] %v1125
        %1142 = vst [vmem:[%s398 + $0x70] sm:$0xff] %v1126
        %1143 = vst [vmem:[%s398 + $0x78] sm:$0xff] %v1127
        %v1144 = vld [vmem:[#allocation2] sm:$0xff]
        %v1145 = vld [vmem:[#allocation2 + $0x8] sm:$0xff]
        %v1146 = vld [vmem:[#allocation2 + $0x10] sm:$0xff]
        %v1147 = vld [vmem:[#allocation2 + $0x18] sm:$0xff]
        %v1148 = vld [vmem:[#allocation2 + $0x20] sm:$0xff]
        %v1149 = vld [vmem:[#allocation2 + $0x28] sm:$0xff]
        %v1150 = vld [vmem:[#allocation2 + $0x30] sm:$0xff]
        %v1151 = vld [vmem:[#allocation2 + $0x38] sm:$0xff]
        %v1152 = vld [vmem:[#allocation2 + $0x40] sm:$0xff]
        %v1153 = vld [vmem:[#allocation2 + $0x48] sm:$0xff]
        %v1154 = vld [vmem:[#allocation2 + $0x50] sm:$0xff]
        %v1155 = vld [vmem:[#allocation2 + $0x58] sm:$0xff]
        %v1156 = vld [vmem:[#allocation2 + $0x60] sm:$0xff]
        %v1157 = vld [vmem:[#allocation2 + $0x68] sm:$0xff]
        %v1158 = vld [vmem:[#allocation2 + $0x70] sm:$0xff]
        %v1159 = vld [vmem:[#allocation2 + $0x78] sm:$0xff]
        %1160 = vmax.xlane.f32.xlu0 %v1112
        %v1161 = vpop.xlane.xlu0 %1160
        %1162 = vmax.xlane.f32.xlu0 %v1113
        %v1163 = vpop.xlane.xlu0 %1162
        %1164 = vmax.xlane.f32.xlu0 %v1114
        %v1165 = vpop.xlane.xlu0 %1164
        %1166 = vmax.xlane.f32.xlu0 %v1115
        %v1167 = vpop.xlane.xlu0 %1166
        %1168 = vmax.xlane.f32.xlu0 %v1116
        %v1169 = vpop.xlane.xlu0 %1168
        %1170 = vmax.xlane.f32.xlu0 %v1117
        %v1171 = vpop.xlane.xlu0 %1170
        %1172 = vmax.xlane.f32.xlu0 %v1118
        %v1173 = vpop.xlane.xlu0 %1172
        %1174 = vmax.xlane.f32.xlu0 %v1119
        %v1175 = vpop.xlane.xlu0 %1174
        %1176 = vmax.xlane.f32.xlu0 %v1120
        %v1177 = vpop.xlane.xlu0 %1176
        %1178 = vmax.xlane.f32.xlu0 %v1121
        %v1179 = vpop.xlane.xlu0 %1178
        %1180 = vmax.xlane.f32.xlu0 %v1122
        %v1181 = vpop.xlane.xlu0 %1180
        %1182 = vmax.xlane.f32.xlu0 %v1123
        %v1183 = vpop.xlane.xlu0 %1182
        %1184 = vmax.xlane.f32.xlu0 %v1124
        %v1185 = vpop.xlane.xlu0 %1184
        %1186 = vmax.xlane.f32.xlu0 %v1125
        %v1187 = vpop.xlane.xlu0 %1186
        %1188 = vmax.xlane.f32.xlu0 %v1126
        %v1189 = vpop.xlane.xlu0 %1188
        %1190 = vmax.xlane.f32.xlu0 %v1127
        %v1191 = vpop.xlane.xlu0 %1190
        %v1192 = vmax.f32 %v1144, %v1161
        %v1193 = vmax.f32 %v1145, %v1163
        %v1194 = vmax.f32 %v1146, %v1165
        %v1195 = vmax.f32 %v1147, %v1167
        %v1196 = vmax.f32 %v1148, %v1169
        %v1197 = vmax.f32 %v1149, %v1171
        %v1198 = vmax.f32 %v1150, %v1173
        %v1199 = vmax.f32 %v1151, %v1175
        %v1200 = vmax.f32 %v1152, %v1177
        %v1201 = vmax.f32 %v1153, %v1179
        %v1202 = vmax.f32 %v1154, %v1181
        %v1203 = vmax.f32 %v1155, %v1183
        %v1204 = vmax.f32 %v1156, %v1185
        %v1205 = vmax.f32 %v1157, %v1187
        %v1206 = vmax.f32 %v1158, %v1189
        %v1207 = vmax.f32 %v1159, %v1191
        %v1208 = vsub.f32 %v1144, %v1192
        %v1209 = vsub.f32 %v1145, %v1193
        %v1210 = vsub.f32 %v1146, %v1194
        %v1211 = vsub.f32 %v1147, %v1195
        %v1212 = vsub.f32 %v1148, %v1196
        %v1213 = vsub.f32 %v1149, %v1197
        %v1214 = vsub.f32 %v1150, %v1198
        %v1215 = vsub.f32 %v1151, %v1199
        %v1216 = vsub.f32 %v1152, %v1200
        %v1217 = vsub.f32 %v1153, %v1201
        %v1218 = vsub.f32 %v1154, %v1202
        %v1219 = vsub.f32 %v1155, %v1203
        %v1220 = vsub.f32 %v1156, %v1204
        %v1221 = vsub.f32 %v1157, %v1205
        %v1222 = vsub.f32 %v1158, %v1206
        %v1223 = vsub.f32 %v1159, %v1207
        %v1224 = vmul.f32 %v1208, 1.442695
        %v1225 = vpow.pop %v1224
        %v1226 = vmul.f32 %v1209, 1.442695
        %v1227 = vpow.pop %v1226
        %v1228 = vmul.f32 %v1210, 1.442695
        %v1229 = vpow.pop %v1228
        %v1230 = vmul.f32 %v1211, 1.442695
        %v1231 = vpow.pop %v1230
        %v1232 = vmul.f32 %v1212, 1.442695
        %v1233 = vpow.pop %v1232
        %v1234 = vmul.f32 %v1213, 1.442695
        %v1235 = vpow.pop %v1234
        %v1236 = vmul.f32 %v1214, 1.442695
        %v1237 = vpow.pop %v1236
        %v1238 = vmul.f32 %v1215, 1.442695
        %v1239 = vpow.pop %v1238
        %v1240 = vmul.f32 %v1216, 1.442695
        %v1241 = vpow.pop %v1240
        %v1242 = vmul.f32 %v1217, 1.442695
        %v1243 = vpow.pop %v1242
        %v1244 = vmul.f32 %v1218, 1.442695
        %v1245 = vpow.pop %v1244
        %v1246 = vmul.f32 %v1219, 1.442695
        %v1247 = vpow.pop %v1246
        %v1248 = vmul.f32 %v1220, 1.442695
        %v1249 = vpow.pop %v1248
        %v1250 = vmul.f32 %v1221, 1.442695
        %v1251 = vpow.pop %v1250
        %v1252 = vmul.f32 %v1222, 1.442695
        %v1253 = vpow.pop %v1252
        %v1254 = vmul.f32 %v1223, 1.442695
        %v1255 = vpow.pop %v1254
        %1257 = vset.pattern.permute.xlu0 0
        %1258 = vperm.xlu0 %1257, %v1192
        %v1259 = vpop.permute.xlu0 %1258
        %1262 = vset.pattern.permute.xlu0 0
        %1263 = vperm.xlu0 %1262, %v1193
        %v1264 = vpop.permute.xlu0 %1263
        %1267 = vset.pattern.permute.xlu0 0
        %1268 = vperm.xlu0 %1267, %v1194
        %v1269 = vpop.permute.xlu0 %1268
        %1272 = vset.pattern.permute.xlu0 0
        %1273 = vperm.xlu0 %1272, %v1195
        %v1274 = vpop.permute.xlu0 %1273
        %1277 = vset.pattern.permute.xlu0 0
        %1278 = vperm.xlu0 %1277, %v1196
        %v1279 = vpop.permute.xlu0 %1278
        %1282 = vset.pattern.permute.xlu0 0
        %1283 = vperm.xlu0 %1282, %v1197
        %v1284 = vpop.permute.xlu0 %1283
        %1287 = vset.pattern.permute.xlu0 0
        %1288 = vperm.xlu0 %1287, %v1198
        %v1289 = vpop.permute.xlu0 %1288
        %1292 = vset.pattern.permute.xlu0 0
        %1293 = vperm.xlu0 %1292, %v1199
        %v1294 = vpop.permute.xlu0 %1293
        %1297 = vset.pattern.permute.xlu0 0
        %1298 = vperm.xlu0 %1297, %v1200
        %v1299 = vpop.permute.xlu0 %1298
        %1302 = vset.pattern.permute.xlu0 0
        %1303 = vperm.xlu0 %1302, %v1201
        %v1304 = vpop.permute.xlu0 %1303
        %1307 = vset.pattern.permute.xlu0 0
        %1308 = vperm.xlu0 %1307, %v1202
        %v1309 = vpop.permute.xlu0 %1308
        %1312 = vset.pattern.permute.xlu0 0
        %1313 = vperm.xlu0 %1312, %v1203
        %v1314 = vpop.permute.xlu0 %1313
        %1317 = vset.pattern.permute.xlu0 0
        %1318 = vperm.xlu0 %1317, %v1204
        %v1319 = vpop.permute.xlu0 %1318
        %1322 = vset.pattern.permute.xlu0 0
        %1323 = vperm.xlu0 %1322, %v1205
        %v1324 = vpop.permute.xlu0 %1323
        %1327 = vset.pattern.permute.xlu0 0
        %1328 = vperm.xlu0 %1327, %v1206
        %v1329 = vpop.permute.xlu0 %1328
        %1332 = vset.pattern.permute.xlu0 0
        %1333 = vperm.xlu0 %1332, %v1207
        %v1334 = vpop.permute.xlu0 %1333
        %v1336 = vsub.f32 %v1112, %v1259
        %v1337 = vsub.f32 %v1113, %v1264
        %v1338 = vsub.f32 %v1114, %v1269
        %v1339 = vsub.f32 %v1115, %v1274
        %v1340 = vsub.f32 %v1116, %v1279
        %v1341 = vsub.f32 %v1117, %v1284
        %v1342 = vsub.f32 %v1118, %v1289
        %v1343 = vsub.f32 %v1119, %v1294
        %v1344 = vsub.f32 %v1120, %v1299
        %v1345 = vsub.f32 %v1121, %v1304
        %v1346 = vsub.f32 %v1122, %v1309
        %v1347 = vsub.f32 %v1123, %v1314
        %v1348 = vsub.f32 %v1124, %v1319
        %v1349 = vsub.f32 %v1125, %v1324
        %v1350 = vsub.f32 %v1126, %v1329
        %v1351 = vsub.f32 %v1127, %v1334
        %v1352 = vmul.f32 %v1336, 1.442695
        %v1353 = vpow.pop %v1352
        %v1354 = vmul.f32 %v1337, 1.442695
        %v1355 = vpow.pop %v1354
        %v1356 = vmul.f32 %v1338, 1.442695
        %v1357 = vpow.pop %v1356
        %v1358 = vmul.f32 %v1339, 1.442695
        %v1359 = vpow.pop %v1358
        %v1360 = vmul.f32 %v1340, 1.442695
        %v1361 = vpow.pop %v1360
        %v1362 = vmul.f32 %v1341, 1.442695
        %v1363 = vpow.pop %v1362
        %v1364 = vmul.f32 %v1342, 1.442695
        %v1365 = vpow.pop %v1364
        %v1366 = vmul.f32 %v1343, 1.442695
        %v1367 = vpow.pop %v1366
        %v1368 = vmul.f32 %v1344, 1.442695
        %v1369 = vpow.pop %v1368
        %v1370 = vmul.f32 %v1345, 1.442695
        %v1371 = vpow.pop %v1370
        %v1372 = vmul.f32 %v1346, 1.442695
        %v1373 = vpow.pop %v1372
        %v1374 = vmul.f32 %v1347, 1.442695
        %v1375 = vpow.pop %v1374
        %v1376 = vmul.f32 %v1348, 1.442695
        %v1377 = vpow.pop %v1376
        %v1378 = vmul.f32 %v1349, 1.442695
        %v1379 = vpow.pop %v1378
        %v1380 = vmul.f32 %v1350, 1.442695
        %v1381 = vpow.pop %v1380
        %v1382 = vmul.f32 %v1351, 1.442695
        %v1383 = vpow.pop %v1382
        %v1384 = vld [vmem:[#allocation3] sm:$0xff]
        %v1385 = vld [vmem:[#allocation3 + $0x8] sm:$0xff]
        %v1386 = vld [vmem:[#allocation3 + $0x10] sm:$0xff]
        %v1387 = vld [vmem:[#allocation3 + $0x18] sm:$0xff]
        %v1388 = vld [vmem:[#allocation3 + $0x20] sm:$0xff]
        %v1389 = vld [vmem:[#allocation3 + $0x28] sm:$0xff]
        %v1390 = vld [vmem:[#allocation3 + $0x30] sm:$0xff]
        %v1391 = vld [vmem:[#allocation3 + $0x38] sm:$0xff]
        %v1392 = vld [vmem:[#allocation3 + $0x40] sm:$0xff]
        %v1393 = vld [vmem:[#allocation3 + $0x48] sm:$0xff]
        %v1394 = vld [vmem:[#allocation3 + $0x50] sm:$0xff]
        %v1395 = vld [vmem:[#allocation3 + $0x58] sm:$0xff]
        %v1396 = vld [vmem:[#allocation3 + $0x60] sm:$0xff]
        %v1397 = vld [vmem:[#allocation3 + $0x68] sm:$0xff]
        %v1398 = vld [vmem:[#allocation3 + $0x70] sm:$0xff]
        %v1399 = vld [vmem:[#allocation3 + $0x78] sm:$0xff]
        %v1400 = vmul.f32 %v1225, %v1384
        %v1401 = vmul.f32 %v1227, %v1385
        %v1402 = vmul.f32 %v1229, %v1386
        %v1403 = vmul.f32 %v1231, %v1387
        %v1404 = vmul.f32 %v1233, %v1388
        %v1405 = vmul.f32 %v1235, %v1389
        %v1406 = vmul.f32 %v1237, %v1390
        %v1407 = vmul.f32 %v1239, %v1391
        %v1408 = vmul.f32 %v1241, %v1392
        %v1409 = vmul.f32 %v1243, %v1393
        %v1410 = vmul.f32 %v1245, %v1394
        %v1411 = vmul.f32 %v1247, %v1395
        %v1412 = vmul.f32 %v1249, %v1396
        %v1413 = vmul.f32 %v1251, %v1397
        %v1414 = vmul.f32 %v1253, %v1398
        %v1415 = vmul.f32 %v1255, %v1399
        %1416 = vadd.xlane.f32.xlu0 %v1353
        %v1417 = vpop.xlane.xlu0 %1416
        %1418 = vadd.xlane.f32.xlu0 %v1355
        %v1419 = vpop.xlane.xlu0 %1418
        %1420 = vadd.xlane.f32.xlu0 %v1357
        %v1421 = vpop.xlane.xlu0 %1420
        %1422 = vadd.xlane.f32.xlu0 %v1359
        %v1423 = vpop.xlane.xlu0 %1422
        %1424 = vadd.xlane.f32.xlu0 %v1361
        %v1425 = vpop.xlane.xlu0 %1424
        %1426 = vadd.xlane.f32.xlu0 %v1363
        %v1427 = vpop.xlane.xlu0 %1426
        %1428 = vadd.xlane.f32.xlu0 %v1365
        %v1429 = vpop.xlane.xlu0 %1428
        %1430 = vadd.xlane.f32.xlu0 %v1367
        %v1431 = vpop.xlane.xlu0 %1430
        %1432 = vadd.xlane.f32.xlu0 %v1369
        %v1433 = vpop.xlane.xlu0 %1432
        %1434 = vadd.xlane.f32.xlu0 %v1371
        %v1435 = vpop.xlane.xlu0 %1434
        %1436 = vadd.xlane.f32.xlu0 %v1373
        %v1437 = vpop.xlane.xlu0 %1436
        %1438 = vadd.xlane.f32.xlu0 %v1375
        %v1439 = vpop.xlane.xlu0 %1438
        %1440 = vadd.xlane.f32.xlu0 %v1377
        %v1441 = vpop.xlane.xlu0 %1440
        %1442 = vadd.xlane.f32.xlu0 %v1379
        %v1443 = vpop.xlane.xlu0 %1442
        %1444 = vadd.xlane.f32.xlu0 %v1381
        %v1445 = vpop.xlane.xlu0 %1444
        %1446 = vadd.xlane.f32.xlu0 %v1383
        %v1447 = vpop.xlane.xlu0 %1446
        %v1448 = vadd.f32 %v1400, %v1417
        %v1449 = vadd.f32 %v1401, %v1419
        %v1450 = vadd.f32 %v1402, %v1421
        %v1451 = vadd.f32 %v1403, %v1423
        %v1452 = vadd.f32 %v1404, %v1425
        %v1453 = vadd.f32 %v1405, %v1427
        %v1454 = vadd.f32 %v1406, %v1429
        %v1455 = vadd.f32 %v1407, %v1431
        %v1456 = vadd.f32 %v1408, %v1433
        %v1457 = vadd.f32 %v1409, %v1435
        %v1458 = vadd.f32 %v1410, %v1437
        %v1459 = vadd.f32 %v1411, %v1439
        %v1460 = vadd.f32 %v1412, %v1441
        %v1461 = vadd.f32 %v1413, %v1443
        %v1462 = vadd.f32 %v1414, %v1445
        %v1463 = vadd.f32 %v1415, %v1447
        %vm1464 = vcmask 7168
        %1465 = vst.msk [vmem:[#allocation3] sm:$0xff] %vm1464, %v1448
        %1466 = vst.msk [vmem:[#allocation3 + $0x8] sm:$0xff] %vm1464, %v1449
        %1467 = vst.msk [vmem:[#allocation3 + $0x10] sm:$0xff] %vm1464, %v1450
        %1468 = vst.msk [vmem:[#allocation3 + $0x18] sm:$0xff] %vm1464, %v1451
        %1469 = vst.msk [vmem:[#allocation3 + $0x20] sm:$0xff] %vm1464, %v1452
        %1470 = vst.msk [vmem:[#allocation3 + $0x28] sm:$0xff] %vm1464, %v1453
        %1471 = vst.msk [vmem:[#allocation3 + $0x30] sm:$0xff] %vm1464, %v1454
        %1472 = vst.msk [vmem:[#allocation3 + $0x38] sm:$0xff] %vm1464, %v1455
        %1473 = vst.msk [vmem:[#allocation3 + $0x40] sm:$0xff] %vm1464, %v1456
        %1474 = vst.msk [vmem:[#allocation3 + $0x48] sm:$0xff] %vm1464, %v1457
        %1475 = vst.msk [vmem:[#allocation3 + $0x50] sm:$0xff] %vm1464, %v1458
        %1476 = vst.msk [vmem:[#allocation3 + $0x58] sm:$0xff] %vm1464, %v1459
        %1477 = vst.msk [vmem:[#allocation3 + $0x60] sm:$0xff] %vm1464, %v1460
        %1478 = vst.msk [vmem:[#allocation3 + $0x68] sm:$0xff] %vm1464, %v1461
        %1479 = vst.msk [vmem:[#allocation3 + $0x70] sm:$0xff] %vm1464, %v1462
        %1480 = vst.msk [vmem:[#allocation3 + $0x78] sm:$0xff] %vm1464, %v1463
        %v1481 = vld [vmem:[#allocation4] sm:$0xff]
        %v1482 = vld [vmem:[#allocation4 + $0x8] sm:$0xff]
        %v1483 = vld [vmem:[#allocation4 + $0x10] sm:$0xff]
        %v1484 = vld [vmem:[#allocation4 + $0x18] sm:$0xff]
        %v1485 = vld [vmem:[#allocation4 + $0x20] sm:$0xff]
        %v1486 = vld [vmem:[#allocation4 + $0x28] sm:$0xff]
        %v1487 = vld [vmem:[#allocation4 + $0x30] sm:$0xff]
        %v1488 = vld [vmem:[#allocation4 + $0x38] sm:$0xff]
        %v1489 = vld [vmem:[#allocation4 + $0x40] sm:$0xff]
        %v1490 = vld [vmem:[#allocation4 + $0x48] sm:$0xff]
        %v1491 = vld [vmem:[#allocation4 + $0x50] sm:$0xff]
        %v1492 = vld [vmem:[#allocation4 + $0x58] sm:$0xff]
        %v1493 = vld [vmem:[#allocation4 + $0x60] sm:$0xff]
        %v1494 = vld [vmem:[#allocation4 + $0x68] sm:$0xff]
        %v1495 = vld [vmem:[#allocation4 + $0x70] sm:$0xff]
        %v1496 = vld [vmem:[#allocation4 + $0x78] sm:$0xff]
        %1498 = vset.pattern.permute.xlu0 0
        %1499 = vperm.xlu0 %1498, %v1225
        %v1500 = vpop.permute.xlu0 %1499
        %1503 = vset.pattern.permute.xlu0 0
        %1504 = vperm.xlu0 %1503, %v1227
        %v1505 = vpop.permute.xlu0 %1504
        %1508 = vset.pattern.permute.xlu0 0
        %1509 = vperm.xlu0 %1508, %v1229
        %v1510 = vpop.permute.xlu0 %1509
        %1513 = vset.pattern.permute.xlu0 0
        %1514 = vperm.xlu0 %1513, %v1231
        %v1515 = vpop.permute.xlu0 %1514
        %1518 = vset.pattern.permute.xlu0 0
        %1519 = vperm.xlu0 %1518, %v1233
        %v1520 = vpop.permute.xlu0 %1519
        %1523 = vset.pattern.permute.xlu0 0
        %1524 = vperm.xlu0 %1523, %v1235
        %v1525 = vpop.permute.xlu0 %1524
        %1528 = vset.pattern.permute.xlu0 0
        %1529 = vperm.xlu0 %1528, %v1237
        %v1530 = vpop.permute.xlu0 %1529
        %1533 = vset.pattern.permute.xlu0 0
        %1534 = vperm.xlu0 %1533, %v1239
        %v1535 = vpop.permute.xlu0 %1534
        %1538 = vset.pattern.permute.xlu0 0
        %1539 = vperm.xlu0 %1538, %v1241
        %v1540 = vpop.permute.xlu0 %1539
        %1543 = vset.pattern.permute.xlu0 0
        %1544 = vperm.xlu0 %1543, %v1243
        %v1545 = vpop.permute.xlu0 %1544
        %1548 = vset.pattern.permute.xlu0 0
        %1549 = vperm.xlu0 %1548, %v1245
        %v1550 = vpop.permute.xlu0 %1549
        %1553 = vset.pattern.permute.xlu0 0
        %1554 = vperm.xlu0 %1553, %v1247
        %v1555 = vpop.permute.xlu0 %1554
        %1558 = vset.pattern.permute.xlu0 0
        %1559 = vperm.xlu0 %1558, %v1249
        %v1560 = vpop.permute.xlu0 %1559
        %1563 = vset.pattern.permute.xlu0 0
        %1564 = vperm.xlu0 %1563, %v1251
        %v1565 = vpop.permute.xlu0 %1564
        %1568 = vset.pattern.permute.xlu0 0
        %1569 = vperm.xlu0 %1568, %v1253
        %v1570 = vpop.permute.xlu0 %1569
        %1573 = vset.pattern.permute.xlu0 0
        %1574 = vperm.xlu0 %1573, %v1255
        %v1575 = vpop.permute.xlu0 %1574
        %v1577 = vmul.f32 %v1500, %v1481
        %v1578 = vmul.f32 %v1505, %v1482
        %v1579 = vmul.f32 %v1510, %v1483
        %v1580 = vmul.f32 %v1515, %v1484
        %v1581 = vmul.f32 %v1520, %v1485
        %v1582 = vmul.f32 %v1525, %v1486
        %v1583 = vmul.f32 %v1530, %v1487
        %v1584 = vmul.f32 %v1535, %v1488
        %v1585 = vmul.f32 %v1540, %v1489
        %v1586 = vmul.f32 %v1545, %v1490
        %v1587 = vmul.f32 %v1550, %v1491
        %v1588 = vmul.f32 %v1555, %v1492
        %v1589 = vmul.f32 %v1560, %v1493
        %v1590 = vmul.f32 %v1565, %v1494
        %v1591 = vmul.f32 %v1570, %v1495
        %v1592 = vmul.f32 %v1575, %v1496
        %v1593 = vpack.c.bf16 %v1355, %v1353
        %v1594 = vpack.c.bf16 %v1359, %v1357
        %v1595 = vpack.c.bf16 %v1363, %v1361
        %v1596 = vpack.c.bf16 %v1367, %v1365
        %v1597 = vpack.c.bf16 %v1371, %v1369
        %v1598 = vpack.c.bf16 %v1375, %v1373
        %v1599 = vpack.c.bf16 %v1379, %v1377
        %v1600 = vpack.c.bf16 %v1383, %v1381
        %v1601 = vpack.c.bf16 %v645, %v644
        %v1602 = vpack.c.bf16 %v647, %v646
        %v1603 = vpack.c.bf16 %v649, %v648
        %v1604 = vpack.c.bf16 %v651, %v650
        %v1605 = vpack.c.bf16 %v653, %v652
        %v1606 = vpack.c.bf16 %v655, %v654
        %v1607 = vpack.c.bf16 %v657, %v656
        %v1608 = vpack.c.bf16 %v659, %v658
        %1609 = vmatpush.bf16.msra.mxu0 %v1608
        %1610 = vmatpush.bf16.msra.mxu0 %v1607
        %1611 = vmatpush.bf16.msra.mxu0 %v1606
        %1612 = vmatpush.bf16.msra.mxu0 %v1605
        %1613 = vmatpush.bf16.msra.mxu0 %v1604
        %1614 = vmatpush.bf16.msra.mxu0 %v1603
        %1615 = vmatpush.bf16.msra.mxu0 %v1602
        %1616 = vmatpush.bf16.msra.mxu0 %v1601
        %1617 = vmatmul.bf16.gmra.mxu0 %v1593
        %v1618 = vpop.f32.mrf.mxu0
        %v1619 = vadd.f32 0.0, %v1618
        %v1620 = vpop.f32.mrf.mxu0
        %v1621 = vadd.f32 0.0, %v1620
        %1622 = vmatmul.bf16.gmra.mxu0 %v1594
        %v1623 = vpop.f32.mrf.mxu0
        %v1624 = vadd.f32 0.0, %v1623
        %v1625 = vpop.f32.mrf.mxu0
        %v1626 = vadd.f32 0.0, %v1625
        %1627 = vmatmul.bf16.gmra.mxu0 %v1595
        %v1628 = vpop.f32.mrf.mxu0
        %v1629 = vadd.f32 0.0, %v1628
        %v1630 = vpop.f32.mrf.mxu0
        %v1631 = vadd.f32 0.0, %v1630
        %1632 = vmatmul.bf16.gmra.mxu0 %v1596
        %v1633 = vpop.f32.mrf.mxu0
        %v1634 = vadd.f32 0.0, %v1633
        %v1635 = vpop.f32.mrf.mxu0
        %v1636 = vadd.f32 0.0, %v1635
        %1637 = vmatmul.bf16.gmra.mxu0 %v1597
        %v1638 = vpop.f32.mrf.mxu0
        %v1639 = vadd.f32 0.0, %v1638
        %v1640 = vpop.f32.mrf.mxu0
        %v1641 = vadd.f32 0.0, %v1640
        %1642 = vmatmul.bf16.gmra.mxu0 %v1598
        %v1643 = vpop.f32.mrf.mxu0
        %v1644 = vadd.f32 0.0, %v1643
        %v1645 = vpop.f32.mrf.mxu0
        %v1646 = vadd.f32 0.0, %v1645
        %1647 = vmatmul.bf16.gmra.mxu0 %v1599
        %v1648 = vpop.f32.mrf.mxu0
        %v1649 = vadd.f32 0.0, %v1648
        %v1650 = vpop.f32.mrf.mxu0
        %v1651 = vadd.f32 0.0, %v1650
        %1652 = vmatmul.bf16.gmra.mxu0 %v1600
        %v1653 = vpop.f32.mrf.mxu0
        %v1654 = vadd.f32 0.0, %v1653
        %v1655 = vpop.f32.mrf.mxu0
        %v1656 = vadd.f32 0.0, %v1655
        %1657 = vdwg.mxu0
        %v1658 = vadd.f32 %v1577, %v1619
        %v1659 = vadd.f32 %v1578, %v1621
        %v1660 = vadd.f32 %v1579, %v1624
        %v1661 = vadd.f32 %v1580, %v1626
        %v1662 = vadd.f32 %v1581, %v1629
        %v1663 = vadd.f32 %v1582, %v1631
        %v1664 = vadd.f32 %v1583, %v1634
        %v1665 = vadd.f32 %v1584, %v1636
        %v1666 = vadd.f32 %v1585, %v1639
        %v1667 = vadd.f32 %v1586, %v1641
        %v1668 = vadd.f32 %v1587, %v1644
        %v1669 = vadd.f32 %v1588, %v1646
        %v1670 = vadd.f32 %v1589, %v1649
        %v1671 = vadd.f32 %v1590, %v1651
        %v1672 = vadd.f32 %v1591, %v1654
        %v1673 = vadd.f32 %v1592, %v1656
        %1674 = vst [vmem:[#allocation4] sm:$0xff] %v1658
        %1675 = vst [vmem:[#allocation4 + $0x8] sm:$0xff] %v1659
        %1676 = vst [vmem:[#allocation4 + $0x10] sm:$0xff] %v1660
        %1677 = vst [vmem:[#allocation4 + $0x18] sm:$0xff] %v1661
        %1678 = vst [vmem:[#allocation4 + $0x20] sm:$0xff] %v1662
        %1679 = vst [vmem:[#allocation4 + $0x28] sm:$0xff] %v1663
        %1680 = vst [vmem:[#allocation4 + $0x30] sm:$0xff] %v1664
        %1681 = vst [vmem:[#allocation4 + $0x38] sm:$0xff] %v1665
        %1682 = vst [vmem:[#allocation4 + $0x40] sm:$0xff] %v1666
        %1683 = vst [vmem:[#allocation4 + $0x48] sm:$0xff] %v1667
        %1684 = vst [vmem:[#allocation4 + $0x50] sm:$0xff] %v1668
        %1685 = vst [vmem:[#allocation4 + $0x58] sm:$0xff] %v1669
        %1686 = vst [vmem:[#allocation4 + $0x60] sm:$0xff] %v1670
        %1687 = vst [vmem:[#allocation4 + $0x68] sm:$0xff] %v1671
        %1688 = vst [vmem:[#allocation4 + $0x70] sm:$0xff] %v1672
        %1689 = vst [vmem:[#allocation4 + $0x78] sm:$0xff] %v1673
        %1690 = vst.msk [vmem:[#allocation2] sm:$0xff] %vm1464, %v1192
        %1691 = vst.msk [vmem:[#allocation2 + $0x8] sm:$0xff] %vm1464, %v1193
        %1692 = vst.msk [vmem:[#allocation2 + $0x10] sm:$0xff] %vm1464, %v1194
        %1693 = vst.msk [vmem:[#allocation2 + $0x18] sm:$0xff] %vm1464, %v1195
        %1694 = vst.msk [vmem:[#allocation2 + $0x20] sm:$0xff] %vm1464, %v1196
        %1695 = vst.msk [vmem:[#allocation2 + $0x28] sm:$0xff] %vm1464, %v1197
        %1696 = vst.msk [vmem:[#allocation2 + $0x30] sm:$0xff] %vm1464, %v1198
        %1697 = vst.msk [vmem:[#allocation2 + $0x38] sm:$0xff] %vm1464, %v1199
        %1698 = vst.msk [vmem:[#allocation2 + $0x40] sm:$0xff] %vm1464, %v1200
        %1699 = vst.msk [vmem:[#allocation2 + $0x48] sm:$0xff] %vm1464, %v1201
        %1700 = vst.msk [vmem:[#allocation2 + $0x50] sm:$0xff] %vm1464, %v1202
        %1701 = vst.msk [vmem:[#allocation2 + $0x58] sm:$0xff] %vm1464, %v1203
        %1702 = vst.msk [vmem:[#allocation2 + $0x60] sm:$0xff] %vm1464, %v1204
        %1703 = vst.msk [vmem:[#allocation2 + $0x68] sm:$0xff] %vm1464, %v1205
        %1704 = vst.msk [vmem:[#allocation2 + $0x70] sm:$0xff] %vm1464, %v1206
        %1705 = vst.msk [vmem:[#allocation2 + $0x78] sm:$0xff] %vm1464, %v1207
        %p1706 = scmp.eq.s32.totalorder %s28, 2
        // Predicated region
        $region65: #{dsmil_b_forward.1} parent=59 // pred_check
          %p1707 = pneg %p1706
        $region66: #{dsmil_b_forward.1} parent=59 // pred_check_branch
          %1709 = sbr.rel (%p1707) target = $region68
        $region67: #{dsmil_b_forward.1} parent=59 // pred_region
          %v1710 = vld [vmem:[#allocation3] sm:$0xff]
          %v1711 = vrcp.pop %v1710
          %v1712 = vld [vmem:[#allocation4] sm:$0xff]
          %1714 = vset.pattern.permute.xlu0 0
          %1715 = vperm.xlu0 %1714, %v1711
          %v1716 = vpop.permute.xlu0 %1715
          %v1718 = vmul.f32 %v1712, %v1716
          %1719 = vst [vmem:[#allocation10] sm:$0xf] %v1718
          %v1720 = vld [vmem:[%s10] sm:$0x1]
          %v1721 = vld [vmem:[%s9] sm:$0xf]
          %1722 = vmatpush.xpose.msra.mxu0 0.0
          %1723 = vmatpush.xpose.msra.mxu0 0.0
          %1724 = vmatpush.xpose.msra.mxu0 0.0
          %1725 = vmatpush.xpose.msra.mxu0 0.0
          %1726 = vmatpush.xpose.msra.mxu0 0.0
          %1727 = vmatpush.xpose.msra.mxu0 0.0
          %1728 = vmatpush.xpose.msra.mxu0 0.0
          %1729 = vmatpush.xpose.msra.mxu0 0.0
          %1730 = vmatpush.xpose.msra.mxu0 0.0
          %1731 = vmatpush.xpose.msra.mxu0 0.0
          %1732 = vmatpush.xpose.msra.mxu0 0.0
          %1733 = vmatpush.xpose.msra.mxu0 0.0
          %1734 = vmatpush.xpose.msra.mxu0 0.0
          %1735 = vmatpush.xpose.msra.mxu0 0.0
          %1736 = vmatpush.xpose.msra.mxu0 0.0
          %1737 = vmatpush.xpose.msra.mxu0 %v1721
          %1738 = vmatmul.f32.gmra.mxu0 %v1718
          %v1739 = vpop.f32.mrf.mxu0
          %v1740 = vadd.f32 0.0, %v1739
          %1741 = vdwg.mxu0
          %v1742 = vadd.f32 %v1720, %v1740
          %s1743 = scalar_lea.vmem %s9, 4
          %v1744 = vld [vmem:[%s1743] sm:$0xf]
          %v1746 = vrot.slane %v1718, 1
          %1748 = vmatpush.xpose.msra.mxu0 0.0
          %1749 = vmatpush.xpose.msra.mxu0 0.0
          %1750 = vmatpush.xpose.msra.mxu0 0.0
          %1751 = vmatpush.xpose.msra.mxu0 0.0
          %1752 = vmatpush.xpose.msra.mxu0 0.0
          %1753 = vmatpush.xpose.msra.mxu0 0.0
          %1754 = vmatpush.xpose.msra.mxu0 0.0
          %1755 = vmatpush.xpose.msra.mxu0 0.0
          %1756 = vmatpush.xpose.msra.mxu0 0.0
          %1757 = vmatpush.xpose.msra.mxu0 0.0
          %1758 = vmatpush.xpose.msra.mxu0 0.0
          %1759 = vmatpush.xpose.msra.mxu0 0.0
          %1760 = vmatpush.xpose.msra.mxu0 0.0
          %1761 = vmatpush.xpose.msra.mxu0 0.0
          %1762 = vmatpush.xpose.msra.mxu0 0.0
          %1763 = vmatpush.xpose.msra.mxu0 %v1744
          %1764 = vmatmul.f32.gmra.mxu0 %v1746
          %v1765 = vpop.f32.mrf.mxu0
          %v1766 = vadd.f32 0.0, %v1765
          %1767 = vdwg.mxu0
          %v1768 = vadd.f32 %v1742, %v1766
          %s1769 = scalar_lea.vmem %s9, 8
          %v1770 = vld [vmem:[%s1769] sm:$0xf]
          %v1771 = vrot.slane %v1718, 2
          %1773 = vmatpush.xpose.msra.mxu0 0.0
          %1774 = vmatpush.xpose.msra.mxu0 0.0
          %1775 = vmatpush.xpose.msra.mxu0 0.0
          %1776 = vmatpush.xpose.msra.mxu0 0.0
          %1777 = vmatpush.xpose.msra.mxu0 0.0
          %1778 = vmatpush.xpose.msra.mxu0 0.0
          %1779 = vmatpush.xpose.msra.mxu0 0.0
          %1780 = vmatpush.xpose.msra.mxu0 0.0
          %1781 = vmatpush.xpose.msra.mxu0 0.0
          %1782 = vmatpush.xpose.msra.mxu0 0.0
          %1783 = vmatpush.xpose.msra.mxu0 0.0
          %1784 = vmatpush.xpose.msra.mxu0 0.0
          %1785 = vmatpush.xpose.msra.mxu0 0.0
          %1786 = vmatpush.xpose.msra.mxu0 0.0
          %1787 = vmatpush.xpose.msra.mxu0 0.0
          %1788 = vmatpush.xpose.msra.mxu0 %v1770
          %1789 = vmatmul.f32.gmra.mxu0 %v1771
          %v1790 = vpop.f32.mrf.mxu0
          %v1791 = vadd.f32 0.0, %v1790
          %1792 = vdwg.mxu0
          %v1793 = vadd.f32 %v1768, %v1791
          %s1794 = scalar_lea.vmem %s9, 12
          %v1795 = vld [vmem:[%s1794] sm:$0xf]
          %v1796 = vrot.slane %v1718, 3
          %1798 = vmatpush.xpose.msra.mxu0 0.0
          %1799 = vmatpush.xpose.msra.mxu0 0.0
          %1800 = vmatpush.xpose.msra.mxu0 0.0
          %1801 = vmatpush.xpose.msra.mxu0 0.0
          %1802 = vmatpush.xpose.msra.mxu0 0.0
          %1803 = vmatpush.xpose.msra.mxu0 0.0
          %1804 = vmatpush.xpose.msra.mxu0 0.0
          %1805 = vmatpush.xpose.msra.mxu0 0.0
          %1806 = vmatpush.xpose.msra.mxu0 0.0
          %1807 = vmatpush.xpose.msra.mxu0 0.0
          %1808 = vmatpush.xpose.msra.mxu0 0.0
          %1809 = vmatpush.xpose.msra.mxu0 0.0
          %1810 = vmatpush.xpose.msra.mxu0 0.0
          %1811 = vmatpush.xpose.msra.mxu0 0.0
          %1812 = vmatpush.xpose.msra.mxu0 0.0
          %1813 = vmatpush.xpose.msra.mxu0 %v1795
          %1814 = vmatmul.f32.gmra.mxu0 %v1796
          %v1815 = vpop.f32.mrf.mxu0
          %v1816 = vadd.f32 0.0, %v1815
          %1817 = vdwg.mxu0
          %v1818 = vadd.f32 %v1793, %v1816
          %vm1819 = vcmask 24576
          %1820 = vst.msk [vmem:[#allocation8] sm:$0x1] %vm1819, %v1818
        $region68: #{dsmil_b_forward.1} parent=59 // pred_fallthru
          _
        %s1821 = sand.u32 %s251, 1
        %s1822 = sand.u32 %s251, 1
        %s1823 = smul.addr %s1822, 128
        %s1824 = scalar_lea.vmem [#allocation7], %s1823
        // Predicated region
        $region69: #{dsmil_b_forward.1} parent=59 // pred_check
          %p1825 = pneg %p261
        $region70: #{dsmil_b_forward.1} parent=59 // pred_check_branch
          %1827 = sbr.rel (%p1825) target = $region72
        $region71: #{dsmil_b_forward.1} parent=59 // pred_region
          %s1828 = smul.addr %s28, 8
          %s1829 = scalar_lea.vmem %s11, %s1828
          // Predicated region
          $region73: #{dsmil_b_forward.1} parent=71 // pred_check
            _
          $region74: #{dsmil_b_forward.1} parent=71 // pred_check_branch
            %1831 = sbr.rel (0) target = $region76
          $region75: #{dsmil_b_forward.1} parent=71 // pred_region
            // Predicated region
            $region77: #{dsmil_b_forward.1} parent=75 // pred_check
              _
            $region78: #{dsmil_b_forward.1} parent=75 // pred_check_branch
              %1833 = sbr.rel (0) target = $region80
            $region79: #{dsmil_b_forward.1} parent=75 // pred_region
              // Predicated region
              $region92: #{dsmil_b_forward.1} parent=79 // pred_check
                _
              $region93: #{dsmil_b_forward.1} parent=79 // pred_check_branch
                %1879 = sbr.rel (0) target = $region95
              $region94: #{dsmil_b_forward.1} parent=79 // pred_region
                loop: start=0, step=1, limit=1
                $region96: #{dsmil_b_forward.1} parent=94 // loop_pre_header
                  _
                $region97: #{dsmil_b_forward.1} parent=94 // loop_header
                  %s1881 = sphi 0, %s1885
                  %p1882 = scmp.ge.s32.totalorder %s1881, 1
                  %s1886 = sphi %s1824, %s1824
                  %s1887 = sphi %s1829, %s1829
                $region98: #{dsmil_b_forward.1} parent=94 // loop_header_branch
                  %1884 = sbr.rel (%p1882) target = $region102
                $region99: #{dsmil_b_forward.1} parent=94 // loop_body
                  %v1888 = vld [vmem:[%s1886] sm:$0xff]
                  %1889 = vst [vmem:[%s1887] sm:$0xff] %v1888
                  %v1890 = vld [vmem:[%s1886 + $0x8] sm:$0xff]
                  %1891 = vst [vmem:[%s1887 + $0x18] sm:$0xff] %v1890
                  %v1892 = vld [vmem:[%s1886 + $0x10] sm:$0xff]
                  %1893 = vst [vmem:[%s1887 + $0x30] sm:$0xff] %v1892
                  %v1894 = vld [vmem:[%s1886 + $0x18] sm:$0xff]
                  %1895 = vst [vmem:[%s1887 + $0x48] sm:$0xff] %v1894
                  %v1896 = vld [vmem:[%s1886 + $0x20] sm:$0xff]
                  %1897 = vst [vmem:[%s1887 + $0x60] sm:$0xff] %v1896
                  %v1898 = vld [vmem:[%s1886 + $0x28] sm:$0xff]
                  %1899 = vst [vmem:[%s1887 + $0x78] sm:$0xff] %v1898
                  %v1900 = vld [vmem:[%s1886 + $0x30] sm:$0xff]
                  %1901 = vst [vmem:[%s1887 + $0x90] sm:$0xff] %v1900
                  %v1902 = vld [vmem:[%s1886 + $0x38] sm:$0xff]
                  %1903 = vst [vmem:[%s1887 + $0xa8] sm:$0xff] %v1902
                  %v1904 = vld [vmem:[%s1886 + $0x40] sm:$0xff]
                  %1905 = vst [vmem:[%s1887 + $0xc0] sm:$0xff] %v1904
                  %v1906 = vld [vmem:[%s1886 + $0x48] sm:$0xff]
                  %1907 = vst [vmem:[%s1887 + $0xd8] sm:$0xff] %v1906
                  %v1908 = vld [vmem:[%s1886 + $0x50] sm:$0xff]
                  %1909 = vst [vmem:[%s1887 + $0xf0] sm:$0xff] %v1908
                  %v1910 = vld [vmem:[%s1886 + $0x58] sm:$0xff]
                  %1911 = vst [vmem:[%s1887 + $0x108] sm:$0xff] %v1910
                  %v1912 = vld [vmem:[%s1886 + $0x60] sm:$0xff]
                  %1913 = vst [vmem:[%s1887 + $0x120] sm:$0xff] %v1912
                  %v1914 = vld [vmem:[%s1886 + $0x68] sm:$0xff]
                  %1915 = vst [vmem:[%s1887 + $0x138] sm:$0xff] %v1914
                  %v1916 = vld [vmem:[%s1886 + $0x70] sm:$0xff]
                  %1917 = vst [vmem:[%s1887 + $0x150] sm:$0xff] %v1916
                  %v1918 = vld [vmem:[%s1886 + $0x78] sm:$0xff]
                  %1919 = vst [vmem:[%s1887 + $0x168] sm:$0xff] %v1918
                $region100: #{dsmil_b_forward.1} parent=94 // loop_footer
                  %s1885 = sadd.s32 1, %s1881
                $region101: #{dsmil_b_forward.1} parent=94 // loop_footer_branch
                  %1880 = sbr.rel target = $region97
                $region102: #{dsmil_b_forward.1} parent=94 // loop_exit
                  _
              $region95: #{dsmil_b_forward.1} parent=79 // pred_fallthru
                _
              // Predicated region
              $region103: #{dsmil_b_forward.1} parent=79 // pred_check
                _
              $region104: #{dsmil_b_forward.1} parent=79 // pred_check_branch
                %1921 = sbr.rel target = $region106
              $region105: #{dsmil_b_forward.1} parent=79 // pred_region
                _
              $region106: #{dsmil_b_forward.1} parent=79 // pred_fallthru
                _
            $region80: #{dsmil_b_forward.1} parent=75 // pred_fallthru
              _
            // Predicated region
            $region81: #{dsmil_b_forward.1} parent=75 // pred_check
              _
            $region82: #{dsmil_b_forward.1} parent=75 // pred_check_branch
              %1835 = sbr.rel target = $region84
            $region83: #{dsmil_b_forward.1} parent=75 // pred_region
              %s1837 = ssub.s32 256, 1
              loop: start=0, step=1, limit=1
              $region85: #{dsmil_b_forward.1} parent=83 // loop_pre_header
                _
              $region86: #{dsmil_b_forward.1} parent=83 // loop_header
                %s1839 = sphi 0, %s1843
                %p1840 = scmp.ge.s32.totalorder %s1839, 1
                %s1844 = sphi %s1824, %s1824
                %s1845 = sphi %s1829, %s1829
              $region87: #{dsmil_b_forward.1} parent=83 // loop_header_branch
                %1842 = sbr.rel (%p1840) target = $region91
              $region88: #{dsmil_b_forward.1} parent=83 // loop_body
                %v1846 = vld [vmem:[%s1844] sm:%s1837]
                %1847 = vst [vmem:[%s1845] sm:%s1837] %v1846
                %v1848 = vld [vmem:[%s1844 + $0x8] sm:%s1837]
                %1849 = vst [vmem:[%s1845 + $0x18] sm:%s1837] %v1848
                %v1850 = vld [vmem:[%s1844 + $0x10] sm:%s1837]
                %1851 = vst [vmem:[%s1845 + $0x30] sm:%s1837] %v1850
                %v1852 = vld [vmem:[%s1844 + $0x18] sm:%s1837]
                %1853 = vst [vmem:[%s1845 + $0x48] sm:%s1837] %v1852
                %v1854 = vld [vmem:[%s1844 + $0x20] sm:%s1837]
                %1855 = vst [vmem:[%s1845 + $0x60] sm:%s1837] %v1854
                %v1856 = vld [vmem:[%s1844 + $0x28] sm:%s1837]
                %1857 = vst [vmem:[%s1845 + $0x78] sm:%s1837] %v1856
                %v1858 = vld [vmem:[%s1844 + $0x30] sm:%s1837]
                %1859 = vst [vmem:[%s1845 + $0x90] sm:%s1837] %v1858
                %v1860 = vld [vmem:[%s1844 + $0x38] sm:%s1837]
                %1861 = vst [vmem:[%s1845 + $0xa8] sm:%s1837] %v1860
                %v1862 = vld [vmem:[%s1844 + $0x40] sm:%s1837]
                %1863 = vst [vmem:[%s1845 + $0xc0] sm:%s1837] %v1862
                %v1864 = vld [vmem:[%s1844 + $0x48] sm:%s1837]
                %1865 = vst [vmem:[%s1845 + $0xd8] sm:%s1837] %v1864
                %v1866 = vld [vmem:[%s1844 + $0x50] sm:%s1837]
                %1867 = vst [vmem:[%s1845 + $0xf0] sm:%s1837] %v1866
                %v1868 = vld [vmem:[%s1844 + $0x58] sm:%s1837]
                %1869 = vst [vmem:[%s1845 + $0x108] sm:%s1837] %v1868
                %v1870 = vld [vmem:[%s1844 + $0x60] sm:%s1837]
                %1871 = vst [vmem:[%s1845 + $0x120] sm:%s1837] %v1870
                %v1872 = vld [vmem:[%s1844 + $0x68] sm:%s1837]
                %1873 = vst [vmem:[%s1845 + $0x138] sm:%s1837] %v1872
                %v1874 = vld [vmem:[%s1844 + $0x70] sm:%s1837]
                %1875 = vst [vmem:[%s1845 + $0x150] sm:%s1837] %v1874
                %v1876 = vld [vmem:[%s1844 + $0x78] sm:%s1837]
                %1877 = vst [vmem:[%s1845 + $0x168] sm:%s1837] %v1876
              $region89: #{dsmil_b_forward.1} parent=83 // loop_footer
                %s1843 = sadd.s32 1, %s1839
              $region90: #{dsmil_b_forward.1} parent=83 // loop_footer_branch
                %1838 = sbr.rel target = $region86
              $region91: #{dsmil_b_forward.1} parent=83 // loop_exit
                _
            $region84: #{dsmil_b_forward.1} parent=75 // pred_fallthru
              _
          $region76: #{dsmil_b_forward.1} parent=71 // pred_fallthru
            _
          %1922 = vnop
        $region72: #{dsmil_b_forward.1} parent=59 // pred_fallthru
          _
        // Predicated region
        $region107: #{dsmil_b_forward.1} parent=59 // pred_check
          %p1923 = pneg %p282
        $region108: #{dsmil_b_forward.1} parent=59 // pred_check_branch
          %1925 = sbr.rel (%p1923) target = $region110
        $region109: #{dsmil_b_forward.1} parent=59 // pred_region
          %1927 = vsyncadd [#allocation9], 0
          %s1929 = sshll.u32 [#allocation8], 4
          %s1930 = int_to_ptr.vmem [resolvable:$true] %s1929
          %s1931 = sshll.u32 %s12, 4
          %s1932 = int_to_ptr.hbm [resolvable:$true] %s1931
          %1934 = dma.vmem_to_hbm [thread:$0]  %s1930, 16, %s1932, [#allocation9]
        $region110: #{dsmil_b_forward.1} parent=59 // pred_fallthru
          _
        // Predicated region
        $region111: #{dsmil_b_forward.1} parent=59 // pred_check
          %p1935 = pneg %p303
        $region112: #{dsmil_b_forward.1} parent=59 // pred_check_branch
          %1937 = sbr.rel (%p1935) target = $region114
        $region113: #{dsmil_b_forward.1} parent=59 // pred_region
          %1939 = vsyncadd [#allocation11], 0
          %s1941 = sshll.u32 [#allocation10], 4
          %s1942 = int_to_ptr.vmem [resolvable:$true] %s1941
          %s1943 = sshll.u32 %s13, 4
          %s1944 = int_to_ptr.hbm [resolvable:$true] %s1943
          %1946 = dma.vmem_to_hbm [thread:$0]  %s1942, 64, %s1944, [#allocation11]
        $region114: #{dsmil_b_forward.1} parent=59 // pred_fallthru
          _
        // Predicated region
        $region115: #{dsmil_b_forward.1} parent=59 // pred_check
          %p1947 = pneg %p282
        $region116: #{dsmil_b_forward.1} parent=59 // pred_check_branch
          %1949 = sbr.rel (%p1947) target = $region118
        $region117: #{dsmil_b_forward.1} parent=59 // pred_region
          %1951 = dma.done [#allocation9], 16
        $region118: #{dsmil_b_forward.1} parent=59 // pred_fallthru
          _
        // Predicated region
        $region119: #{dsmil_b_forward.1} parent=59 // pred_check
          %p1952 = pneg %p303
        $region120: #{dsmil_b_forward.1} parent=59 // pred_check_branch
          %1954 = sbr.rel (%p1952) target = $region122
        $region121: #{dsmil_b_forward.1} parent=59 // pred_region
          %1956 = dma.done [#allocation11], 64
        $region122: #{dsmil_b_forward.1} parent=59 // pred_fallthru
          _
      $region60: #{dsmil_b_forward.1} parent=5 // pred_fallthru
        _
      %p1957 = scmp.le.s32.totalorder 2, %s23
      // Predicated region
      $region123: #{dsmil_b_forward.1} parent=5 // pred_check
        %p1958 = pneg %p1957
      $region124: #{dsmil_b_forward.1} parent=5 // pred_check_branch
        %1960 = sbr.rel (%p1958) target = $region126
      $region125: #{dsmil_b_forward.1} parent=5 // pred_region
        %s1961 = ssub.s32 %s23, 2
        // Predicated region
        $region127: #{dsmil_b_forward.1} parent=125 // pred_check
          %p1962 = pneg %p267
        $region128: #{dsmil_b_forward.1} parent=125 // pred_check_branch
          %1964 = sbr.rel (%p1962) target = $region130
        $region129: #{dsmil_b_forward.1} parent=125 // pred_region
          %s1965 = sand.u32 %s252, 1
          %s1966 = sand.u32 %s252, 1
          %s1967 = smul.addr %s1966, 128
          %s1968 = scalar_lea.vmem [#allocation7], %s1967
        $region130: #{dsmil_b_forward.1} parent=125 // pred_fallthru
          _
      $region126: #{dsmil_b_forward.1} parent=5 // pred_fallthru
        _
    $region6: #{dsmil_b_forward.1} parent=1 // loop_footer
      %s27 = sadd.s32 1, %s23
    $region7: #{dsmil_b_forward.1} parent=1 // loop_footer_branch
      %22 = sbr.rel target = $region3
    $region8: #{dsmil_b_forward.1} parent=1 // loop_exit
      _
    %1969 = vsyncpa [#allocation9], 1
    %s1970 = scalar_lea.sflag [#allocation9], 1
    %1971 = vsyncpa %s1970, 1
    %1972 = vsyncpa [#allocation11], 1

</llo_original>
